<compile_context>
chip_gen: v6e
topology: v6e:2x2x1
jax: 0.10.0
libtpu: 0.0.40
codegen_flags: <defaults>
</compile_context>

<pallas_src>
import functools

import jax
import jax.numpy as jnp
from jax import lax
from jax.experimental import pallas as pl
from jax.experimental.pallas import tpu as pltpu


# ----------------------------- kernel -------------------------------------- #

def rnn_fc_fused_kernel(x_ref, h0_ref, wih0_ref, whh0_ref, wih1_ref, whh1_ref,
                        b0_ref, b1_ref, wfc_ref, bfc_ref,
                        out_ref, hn_ref, h1_all, h2_all, *, seq_len, batch):
    """2-layer tanh RNN + Linear head, scheduled layer-by-layer.

    x_ref   : (T*B, I)  time-major flattened input (row t*B + b = x[b, t])
    h0_ref  : (2, B, H) initial hidden state
    out_ref : (T*B, C)  time-major logits (batch-major permute done in wrapper)
    hn_ref  : (2, B, H) final hidden state
    h1_all / h2_all : (T*B, H) VMEM scratch holding every step's hidden state.
    """
    # Recurrent weights stay register/VMEM resident across the unrolled loops.
    whh0 = whh0_ref[...]          # (H, H)
    whh1 = whh1_ref[...]          # (H, H)

    # ---- Layer 0 ---------------------------------------------------------- #
    # Input projection for EVERY timestep in one fat MXU matmul; bias folded
    # in once (not T times inside the loop).
    xw0 = (jnp.dot(x_ref[...], wih0_ref[...],
                   preferred_element_type=jnp.float32)
           + b0_ref[...])                                        # (T*B, H)

    h1 = h0_ref[0]                # (B, H) register-resident carry
    for t in range(seq_len):      # static full unroll; all indices constant
        h1 = jnp.tanh(xw0[t * batch:(t + 1) * batch, :]
                      + jnp.dot(h1, whh0, preferred_element_type=jnp.float32))
        h1_all[t * batch:(t + 1) * batch, :] = h1

    # ---- Layer 1 ---------------------------------------------------------- #
    # Layer-1 input projection for every timestep as one fat matmul; bias once.
    xw1 = (jnp.dot(h1_all[...], wih1_ref[...],
                   preferred_element_type=jnp.float32)
           + b1_ref[...])                                        # (T*B, H)

    h2 = h0_ref[1]                # (B, H)
    for t in range(seq_len):
        h2 = jnp.tanh(xw1[t * batch:(t + 1) * batch, :]
                      + jnp.dot(h2, whh1, preferred_element_type=jnp.float32))
        h2_all[t * batch:(t + 1) * batch, :] = h2

    # ---- FC head: one fat matmul, one lane-contiguous store --------------- #
    out_ref[...] = (jnp.dot(h2_all[...], wfc_ref[...],
                            preferred_element_type=jnp.float32)
                    + bfc_ref[...])

    # Final hidden state, written exactly once.
    hn_ref[0] = h1
    hn_ref[1] = h2


# ----------------------------- wrapper -------------------------------------- #

def pack_params(params):
    """One-time weight prep (transposes / bias sums) done OUTSIDE the per-call
    path, so the per-forward work is just the pallas_call + tiny x permute."""
    H = params["w_hh_l0"].shape[0]
    C = params["w_fc"].shape[0]
    return {
        "wih0": params["w_ih_l0"].T,                               # (I, H)
        "whh0": params["w_hh_l0"].T,                               # (H, H)
        "wih1": params["w_ih_l1"].T,                               # (H, H)
        "whh1": params["w_hh_l1"].T,                               # (H, H)
        "b0": (params["b_ih_l0"] + params["b_hh_l0"]).reshape(1, H),
        "b1": (params["b_ih_l1"] + params["b_hh_l1"]).reshape(1, H),
        "wfc": params["w_fc"].T,                                   # (H, C)
        "bfc": params["b_fc"].reshape(1, C),
    }


@jax.jit
def rnn_model_forward(x_bti, h0, packed):
    """Equivalent of RNNModel.forward(x, h) -> (logits, h_n).

    x_bti: (B, T, input_size) batch_first, h0: (2, B, hidden_size),
    packed: output of pack_params(). Returns logits (B*T, num_classes) and h_n.
    """
    B, T, I = x_bti.shape
    H = packed["whh0"].shape[0]
    C = packed["wfc"].shape[1]

    # Time-major, flattened input rows: row t*B + b = x[b, t].
    x_2d = jnp.transpose(x_bti.astype(jnp.float32), (1, 0, 2)).reshape(T * B, I)

    out_tbc, h_n = pl.pallas_call(
        functools.partial(rnn_fc_fused_kernel, seq_len=T, batch=B),
        out_shape=(jax.ShapeDtypeStruct((T * B, C), jnp.float32),
                   jax.ShapeDtypeStruct((2, B, H), jnp.float32)),
        grid=(1,),
        in_specs=[
            pl.BlockSpec((T * B, I), lambda i: (0, 0)),      # x (time-major)
            pl.BlockSpec((2, B, H), lambda i: (0, 0, 0)),    # h0
            pl.BlockSpec((I, H), lambda i: (0, 0)),          # W_ih l0
            pl.BlockSpec((H, H), lambda i: (0, 0)),          # W_hh l0
            pl.BlockSpec((H, H), lambda i: (0, 0)),          # W_ih l1
            pl.BlockSpec((H, H), lambda i: (0, 0)),          # W_hh l1
            pl.BlockSpec((1, H), lambda i: (0, 0)),          # b l0 (pre-summed)
            pl.BlockSpec((1, H), lambda i: (0, 0)),          # b l1 (pre-summed)
            pl.BlockSpec((H, C), lambda i: (0, 0)),          # W_fc
            pl.BlockSpec((1, C), lambda i: (0, 0)),          # b_fc
        ],
        out_specs=(
            pl.BlockSpec((T * B, C), lambda i: (0, 0)),      # logits, time-major
            pl.BlockSpec((2, B, H), lambda i: (0, 0, 0)),    # h_n
        ),
        scratch_shapes=[
            pltpu.VMEM((T * B, H), jnp.float32),             # h1 for all steps
            pltpu.VMEM((T * B, H), jnp.float32),             # h2 for all steps
        ],
        compiler_params=pltpu.CompilerParams(
            dimension_semantics=("arbitrary",)),
    )(x_2d, h0.astype(jnp.float32),
      packed["wih0"], packed["whh0"], packed["wih1"], packed["whh1"],
      packed["b0"], packed["b1"], packed["wfc"], packed["bfc"])

    # Kernel output is time-major (T*B, C); PyTorch flattens batch_first
    # (B, T, C) -> (B*T, C). The tiny permute happens in XLA (2 KB).
    logits = jnp.transpose(out_tbc.reshape(T, B, C), (1, 0, 2)).reshape(B * T, C)
    return logits, h_n


# --------------------------- reference + main ------------------------------- #

def ref_forward(x, h0, p):
    """Pure-JAX reference matching torch.nn.RNN(num_layers=2) + Linear."""
    B, T, _ = x.shape
    hp = lax.Precision.HIGHEST
    h1, h2 = h0[0], h0[1]
    outs = []
    for t in range(T):
        xt = x[:, t, :]
        h1 = jnp.tanh(jnp.dot(xt, p["w_ih_l0"].T, precision=hp) + p["b_ih_l0"]
                      + jnp.dot(h1, p["w_hh_l0"].T, precision=hp) + p["b_hh_l0"])
        h2 = jnp.tanh(jnp.dot(h1, p["w_ih_l1"].T, precision=hp) + p["b_ih_l1"]
                      + jnp.dot(h2, p["w_hh_l1"].T, precision=hp) + p["b_hh_l1"])
        outs.append(h2)
    out = jnp.stack(outs, axis=1)                       # (B, T, H)
    flat = out.reshape(B * T, out.shape[-1])
    logits = jnp.dot(flat, p["w_fc"].T, precision=hp) + p["b_fc"]
    h_n = jnp.stack([h1, h2], axis=0)
    return logits, h_n


def init_params(key, input_size, hidden_size, num_classes):
    """Deterministic init mimicking PyTorch's U(-1/sqrt(H), 1/sqrt(H))."""
    k = 1.0 / jnp.sqrt(jnp.float32(hidden_size))
    names_shapes = [
        ("w_ih_l0", (hidden_size, input_size)),
        ("w_hh_l0", (hidden_size, hidden_size)),
        ("b_ih_l0", (hidden_size,)),
        ("b_hh_l0", (hidden_size,)),
        ("w_ih_l1", (hidden_size, hidden_size)),
        ("w_hh_l1", (hidden_size, hidden_size)),
        ("b_ih_l1", (hidden_size,)),
        ("b_hh_l1", (hidden_size,)),
        ("w_fc", (num_classes, hidden_size)),
        ("b_fc", (num_classes,)),
    ]
    params = {}
    keys = jax.random.split(key, len(names_shapes))
    for (name, shape), kk in zip(names_shapes, keys):
        params[name] = jax.random.uniform(kk, shape, jnp.float32, -k, k)
    return params


if __name__ == "__main__":
    # Small shapes consistent with the module (char-level RNN):
    # input_size = num_classes = vocab size, hidden_size = 64, num_layers = 2.
    B, T = 2, 8
    input_size = 32        # stands in for len(chars); torch code reads vocab from .pth
    hidden_size = 64
    num_classes = input_size

    root = jax.random.PRNGKey(0)
    k_params, k_x = jax.random.split(root)
    params = init_params(k_params, input_size, hidden_size, num_classes)
    packed = pack_params(params)   # one-time weight prep, outside per-call path

    x = jax.random.normal(k_x, (B, T, input_size), jnp.float32)
    h0 = jnp.zeros((2, B, hidden_size), jnp.float32)   # init_hidden(batch_size)

    logits, h_n = jax.block_until_ready(rnn_model_forward(x, h0, packed))

    ref_logits, ref_hn = ref_forward(x, h0, params)
    assert logits.shape == (B * T, num_classes)
    assert h_n.shape == (2, B, hidden_size)
    assert jnp.allclose(logits, ref_logits, atol=1e-4, rtol=1e-4)
    assert jnp.allclose(h_n, ref_hn, atol=1e-4, rtol=1e-4)

    print("KERNEL_OK")
</pallas_src>

<mosaic_0001>
module attributes {stable_mosaic.version = 11 : i64} {
  func.func @rnn_fc_fused_kernel(%arg0: i32, %arg1: memref<16x32xf32, #tpu.memory_space<vmem>>, %arg2: memref<2x2x64xf32, #tpu.memory_space<vmem>>, %arg3: memref<32x64xf32, #tpu.memory_space<vmem>>, %arg4: memref<64x64xf32, #tpu.memory_space<vmem>>, %arg5: memref<64x64xf32, #tpu.memory_space<vmem>>, %arg6: memref<64x64xf32, #tpu.memory_space<vmem>>, %arg7: memref<1x64xf32, #tpu.memory_space<vmem>>, %arg8: memref<1x64xf32, #tpu.memory_space<vmem>>, %arg9: memref<64x32xf32, #tpu.memory_space<vmem>>, %arg10: memref<1x32xf32, #tpu.memory_space<vmem>>, %arg11: memref<16x32xf32, #tpu.memory_space<vmem>>, %arg12: memref<2x2x64xf32, #tpu.memory_space<vmem>>, %arg13: memref<16x64xf32, #tpu.memory_space<vmem>>, %arg14: memref<16x64xf32, #tpu.memory_space<vmem>>) attributes {dimension_semantics = [#tpu.dimension_semantics<arbitrary>], iteration_bounds = array<i64: 1>, scalar_prefetch = 0 : i64, scratch_operands = 2 : i64, tpu.core_type = #tpu.core_type<tc>, window_params = [{pipeline_mode = #tpu.pipeline_mode<synchronous>, transform_indices = @transform_0, window_bounds = array<i64: 16, 32>}, {pipeline_mode = #tpu.pipeline_mode<synchronous>, transform_indices = @transform_1, window_bounds = array<i64: 2, 2, 64>}, {pipeline_mode = #tpu.pipeline_mode<synchronous>, transform_indices = @transform_2, window_bounds = array<i64: 32, 64>}, {pipeline_mode = #tpu.pipeline_mode<synchronous>, transform_indices = @transform_3, window_bounds = array<i64: 64, 64>}, {pipeline_mode = #tpu.pipeline_mode<synchronous>, transform_indices = @transform_4, window_bounds = array<i64: 64, 64>}, {pipeline_mode = #tpu.pipeline_mode<synchronous>, transform_indices = @transform_5, window_bounds = array<i64: 64, 64>}, {pipeline_mode = #tpu.pipeline_mode<synchronous>, transform_indices = @transform_6, window_bounds = array<i64: 1, 64>}, {pipeline_mode = #tpu.pipeline_mode<synchronous>, transform_indices = @transform_7, window_bounds = array<i64: 1, 64>}, {pipeline_mode = #tpu.pipeline_mode<synchronous>, transform_indices = @transform_8, window_bounds = array<i64: 64, 32>}, {pipeline_mode = #tpu.pipeline_mode<synchronous>, transform_indices = @transform_9, window_bounds = array<i64: 1, 32>}, {pipeline_mode = #tpu.pipeline_mode<synchronous>, transform_indices = @transform_10, window_bounds = array<i64: 16, 32>}, {pipeline_mode = #tpu.pipeline_mode<synchronous>, transform_indices = @transform_11, window_bounds = array<i64: 2, 2, 64>}]} {
    %c0 = arith.constant 0 : index
    %c0_0 = arith.constant 0 : index
    %0 = vector.load %arg4[%c0, %c0_0] : memref<64x64xf32, #tpu.memory_space<vmem>>, vector<64x64xf32>
    %c0_1 = arith.constant 0 : index
    %c0_2 = arith.constant 0 : index
    %1 = vector.load %arg6[%c0_1, %c0_2] : memref<64x64xf32, #tpu.memory_space<vmem>>, vector<64x64xf32>
    %c0_3 = arith.constant 0 : index
    %c0_4 = arith.constant 0 : index
    %2 = vector.load %arg1[%c0_3, %c0_4] : memref<16x32xf32, #tpu.memory_space<vmem>>, vector<16x32xf32>
    %c0_5 = arith.constant 0 : index
    %c0_6 = arith.constant 0 : index
    %3 = vector.load %arg3[%c0_5, %c0_6] : memref<32x64xf32, #tpu.memory_space<vmem>>, vector<32x64xf32>
    %cst = arith.constant dense<0.000000e+00> : vector<16x64xf32>
    %4 = tpu.matmul %2, %3, %cst {dimension_numbers = #tpu.dot_dimension_numbers<[1], [0], [0], [1], [0, 0, 1, 1], [], []>} : vector<16x32xf32>, vector<32x64xf32>, vector<16x64xf32> -> vector<16x64xf32>
    %c0_7 = arith.constant 0 : index
    %c0_8 = arith.constant 0 : index
    %5 = vector.load %arg7[%c0_7, %c0_8] : memref<1x64xf32, #tpu.memory_space<vmem>>, vector<1x64xf32>
    %6 = vector.broadcast %5 : vector<1x64xf32> to vector<16x64xf32>
    %7 = arith.addf %4, %6 : vector<16x64xf32>
    %c0_9 = arith.constant 0 : index
    %c0_10 = arith.constant 0 : index
    %c0_11 = arith.constant 0 : index
    %8 = vector.load %arg2[%c0_9, %c0_10, %c0_11] : memref<2x2x64xf32, #tpu.memory_space<vmem>>, vector<1x2x64xf32>
    %9 = vector.shape_cast %8 : vector<1x2x64xf32> to vector<2x64xf32>
    %10 = vector.extract_strided_slice %7 {offsets = [0, 0], sizes = [2, 64], strides = [1, 1]} : vector<16x64xf32> to vector<2x64xf32>
    %cst_12 = arith.constant dense<0.000000e+00> : vector<2x64xf32>
    %11 = tpu.matmul %9, %0, %cst_12 {dimension_numbers = #tpu.dot_dimension_numbers<[1], [0], [0], [1], [0, 0, 1, 1], [], []>} : vector<2x64xf32>, vector<64x64xf32>, vector<2x64xf32> -> vector<2x64xf32>
    %12 = arith.addf %10, %11 : vector<2x64xf32>
    %13 = math.tanh %12 : vector<2x64xf32>
    %c0_13 = arith.constant 0 : index
    %c0_14 = arith.constant 0 : index
    %14 = vector.load %arg13[%c0_13, %c0_14] : memref<16x64xf32, #tpu.memory_space<vmem>>, vector<2x64xf32>
    tpu.vector_store %arg13[%c0_13, %c0_14], %13 {strides = array<i32>} : memref<16x64xf32, #tpu.memory_space<vmem>>, vector<2x64xf32>,
    %15 = vector.extract_strided_slice %7 {offsets = [2, 0], sizes = [2, 64], strides = [1, 1]} : vector<16x64xf32> to vector<2x64xf32>
    %cst_15 = arith.constant dense<0.000000e+00> : vector<2x64xf32>
    %16 = tpu.matmul %13, %0, %cst_15 {dimension_numbers = #tpu.dot_dimension_numbers<[1], [0], [0], [1], [0, 0, 1, 1], [], []>} : vector<2x64xf32>, vector<64x64xf32>, vector<2x64xf32> -> vector<2x64xf32>
    %17 = arith.addf %15, %16 : vector<2x64xf32>
    %18 = math.tanh %17 : vector<2x64xf32>
    %c2 = arith.constant 2 : index
    %c0_16 = arith.constant 0 : index
    %19 = vector.load %arg13[%c2, %c0_16] : memref<16x64xf32, #tpu.memory_space<vmem>>, vector<2x64xf32>
    tpu.vector_store %arg13[%c2, %c0_16], %18 {strides = array<i32>} : memref<16x64xf32, #tpu.memory_space<vmem>>, vector<2x64xf32>,
    %20 = vector.extract_strided_slice %7 {offsets = [4, 0], sizes = [2, 64], strides = [1, 1]} : vector<16x64xf32> to vector<2x64xf32>
    %cst_17 = arith.constant dense<0.000000e+00> : vector<2x64xf32>
    %21 = tpu.matmul %18, %0, %cst_17 {dimension_numbers = #tpu.dot_dimension_numbers<[1], [0], [0], [1], [0, 0, 1, 1], [], []>} : vector<2x64xf32>, vector<64x64xf32>, vector<2x64xf32> -> vector<2x64xf32>
    %22 = arith.addf %20, %21 : vector<2x64xf32>
    %23 = math.tanh %22 : vector<2x64xf32>
    %c4 = arith.constant 4 : index
    %c0_18 = arith.constant 0 : index
    %24 = vector.load %arg13[%c4, %c0_18] : memref<16x64xf32, #tpu.memory_space<vmem>>, vector<2x64xf32>
    tpu.vector_store %arg13[%c4, %c0_18], %23 {strides = array<i32>} : memref<16x64xf32, #tpu.memory_space<vmem>>, vector<2x64xf32>,
    %25 = vector.extract_strided_slice %7 {offsets = [6, 0], sizes = [2, 64], strides = [1, 1]} : vector<16x64xf32> to vector<2x64xf32>
    %cst_19 = arith.constant dense<0.000000e+00> : vector<2x64xf32>
    %26 = tpu.matmul %23, %0, %cst_19 {dimension_numbers = #tpu.dot_dimension_numbers<[1], [0], [0], [1], [0, 0, 1, 1], [], []>} : vector<2x64xf32>, vector<64x64xf32>, vector<2x64xf32> -> vector<2x64xf32>
    %27 = arith.addf %25, %26 : vector<2x64xf32>
    %28 = math.tanh %27 : vector<2x64xf32>
    %c6 = arith.constant 6 : index
    %c0_20 = arith.constant 0 : index
    %29 = vector.load %arg13[%c6, %c0_20] : memref<16x64xf32, #tpu.memory_space<vmem>>, vector<2x64xf32>
    tpu.vector_store %arg13[%c6, %c0_20], %28 {strides = array<i32>} : memref<16x64xf32, #tpu.memory_space<vmem>>, vector<2x64xf32>,
    %30 = vector.extract_strided_slice %7 {offsets = [8, 0], sizes = [2, 64], strides = [1, 1]} : vector<16x64xf32> to vector<2x64xf32>
    %cst_21 = arith.constant dense<0.000000e+00> : vector<2x64xf32>
    %31 = tpu.matmul %28, %0, %cst_21 {dimension_numbers = #tpu.dot_dimension_numbers<[1], [0], [0], [1], [0, 0, 1, 1], [], []>} : vector<2x64xf32>, vector<64x64xf32>, vector<2x64xf32> -> vector<2x64xf32>
    %32 = arith.addf %30, %31 : vector<2x64xf32>
    %33 = math.tanh %32 : vector<2x64xf32>
    %c8 = arith.constant 8 : index
    %c0_22 = arith.constant 0 : index
    %34 = vector.load %arg13[%c8, %c0_22] : memref<16x64xf32, #tpu.memory_space<vmem>>, vector<2x64xf32>
    tpu.vector_store %arg13[%c8, %c0_22], %33 {strides = array<i32>} : memref<16x64xf32, #tpu.memory_space<vmem>>, vector<2x64xf32>,
    %35 = vector.extract_strided_slice %7 {offsets = [10, 0], sizes = [2, 64], strides = [1, 1]} : vector<16x64xf32> to vector<2x64xf32>
    %cst_23 = arith.constant dense<0.000000e+00> : vector<2x64xf32>
    %36 = tpu.matmul %33, %0, %cst_23 {dimension_numbers = #tpu.dot_dimension_numbers<[1], [0], [0], [1], [0, 0, 1, 1], [], []>} : vector<2x64xf32>, vector<64x64xf32>, vector<2x64xf32> -> vector<2x64xf32>
    %37 = arith.addf %35, %36 : vector<2x64xf32>
    %38 = math.tanh %37 : vector<2x64xf32>
    %c10 = arith.constant 10 : index
    %c0_24 = arith.constant 0 : index
    %39 = vector.load %arg13[%c10, %c0_24] : memref<16x64xf32, #tpu.memory_space<vmem>>, vector<2x64xf32>
    tpu.vector_store %arg13[%c10, %c0_24], %38 {strides = array<i32>} : memref<16x64xf32, #tpu.memory_space<vmem>>, vector<2x64xf32>,
    %40 = vector.extract_strided_slice %7 {offsets = [12, 0], sizes = [2, 64], strides = [1, 1]} : vector<16x64xf32> to vector<2x64xf32>
    %cst_25 = arith.constant dense<0.000000e+00> : vector<2x64xf32>
    %41 = tpu.matmul %38, %0, %cst_25 {dimension_numbers = #tpu.dot_dimension_numbers<[1], [0], [0], [1], [0, 0, 1, 1], [], []>} : vector<2x64xf32>, vector<64x64xf32>, vector<2x64xf32> -> vector<2x64xf32>
    %42 = arith.addf %40, %41 : vector<2x64xf32>
    %43 = math.tanh %42 : vector<2x64xf32>
    %c12 = arith.constant 12 : index
    %c0_26 = arith.constant 0 : index
    %44 = vector.load %arg13[%c12, %c0_26] : memref<16x64xf32, #tpu.memory_space<vmem>>, vector<2x64xf32>
    tpu.vector_store %arg13[%c12, %c0_26], %43 {strides = array<i32>} : memref<16x64xf32, #tpu.memory_space<vmem>>, vector<2x64xf32>,
    %45 = vector.extract_strided_slice %7 {offsets = [14, 0], sizes = [2, 64], strides = [1, 1]} : vector<16x64xf32> to vector<2x64xf32>
    %cst_27 = arith.constant dense<0.000000e+00> : vector<2x64xf32>
    %46 = tpu.matmul %43, %0, %cst_27 {dimension_numbers = #tpu.dot_dimension_numbers<[1], [0], [0], [1], [0, 0, 1, 1], [], []>} : vector<2x64xf32>, vector<64x64xf32>, vector<2x64xf32> -> vector<2x64xf32>
    %47 = arith.addf %45, %46 : vector<2x64xf32>
    %48 = math.tanh %47 : vector<2x64xf32>
    %c14 = arith.constant 14 : index
    %c0_28 = arith.constant 0 : index
    %49 = vector.load %arg13[%c14, %c0_28] : memref<16x64xf32, #tpu.memory_space<vmem>>, vector<2x64xf32>
    tpu.vector_store %arg13[%c14, %c0_28], %48 {strides = array<i32>} : memref<16x64xf32, #tpu.memory_space<vmem>>, vector<2x64xf32>,
    %c0_29 = arith.constant 0 : index
    %c0_30 = arith.constant 0 : index
    %50 = vector.load %arg13[%c0_29, %c0_30] : memref<16x64xf32, #tpu.memory_space<vmem>>, vector<16x64xf32>
    %c0_31 = arith.constant 0 : index
    %c0_32 = arith.constant 0 : index
    %51 = vector.load %arg5[%c0_31, %c0_32] : memref<64x64xf32, #tpu.memory_space<vmem>>, vector<64x64xf32>
    %cst_33 = arith.constant dense<0.000000e+00> : vector<16x64xf32>
    %52 = tpu.matmul %50, %51, %cst_33 {dimension_numbers = #tpu.dot_dimension_numbers<[1], [0], [0], [1], [0, 0, 1, 1], [], []>} : vector<16x64xf32>, vector<64x64xf32>, vector<16x64xf32> -> vector<16x64xf32>
    %c0_34 = arith.constant 0 : index
    %c0_35 = arith.constant 0 : index
    %53 = vector.load %arg8[%c0_34, %c0_35] : memref<1x64xf32, #tpu.memory_space<vmem>>, vector<1x64xf32>
    %54 = vector.broadcast %53 : vector<1x64xf32> to vector<16x64xf32>
    %55 = arith.addf %52, %54 : vector<16x64xf32>
    %c1 = arith.constant 1 : index
    %c0_36 = arith.constant 0 : index
    %c0_37 = arith.constant 0 : index
    %56 = vector.load %arg2[%c1, %c0_36, %c0_37] : memref<2x2x64xf32, #tpu.memory_space<vmem>>, vector<1x2x64xf32>
    %57 = vector.shape_cast %56 : vector<1x2x64xf32> to vector<2x64xf32>
    %58 = vector.extract_strided_slice %55 {offsets = [0, 0], sizes = [2, 64], strides = [1, 1]} : vector<16x64xf32> to vector<2x64xf32>
    %cst_38 = arith.constant dense<0.000000e+00> : vector<2x64xf32>
    %59 = tpu.matmul %57, %1, %cst_38 {dimension_numbers = #tpu.dot_dimension_numbers<[1], [0], [0], [1], [0, 0, 1, 1], [], []>} : vector<2x64xf32>, vector<64x64xf32>, vector<2x64xf32> -> vector<2x64xf32>
    %60 = arith.addf %58, %59 : vector<2x64xf32>
    %61 = math.tanh %60 : vector<2x64xf32>
    %c0_39 = arith.constant 0 : index
    %c0_40 = arith.constant 0 : index
    %62 = vector.load %arg14[%c0_39, %c0_40] : memref<16x64xf32, #tpu.memory_space<vmem>>, vector<2x64xf32>
    tpu.vector_store %arg14[%c0_39, %c0_40], %61 {strides = array<i32>} : memref<16x64xf32, #tpu.memory_space<vmem>>, vector<2x64xf32>,
    %63 = vector.extract_strided_slice %55 {offsets = [2, 0], sizes = [2, 64], strides = [1, 1]} : vector<16x64xf32> to vector<2x64xf32>
    %cst_41 = arith.constant dense<0.000000e+00> : vector<2x64xf32>
    %64 = tpu.matmul %61, %1, %cst_41 {dimension_numbers = #tpu.dot_dimension_numbers<[1], [0], [0], [1], [0, 0, 1, 1], [], []>} : vector<2x64xf32>, vector<64x64xf32>, vector<2x64xf32> -> vector<2x64xf32>
    %65 = arith.addf %63, %64 : vector<2x64xf32>
    %66 = math.tanh %65 : vector<2x64xf32>
    %c2_42 = arith.constant 2 : index
    %c0_43 = arith.constant 0 : index
    %67 = vector.load %arg14[%c2_42, %c0_43] : memref<16x64xf32, #tpu.memory_space<vmem>>, vector<2x64xf32>
    tpu.vector_store %arg14[%c2_42, %c0_43], %66 {strides = array<i32>} : memref<16x64xf32, #tpu.memory_space<vmem>>, vector<2x64xf32>,
    %68 = vector.extract_strided_slice %55 {offsets = [4, 0], sizes = [2, 64], strides = [1, 1]} : vector<16x64xf32> to vector<2x64xf32>
    %cst_44 = arith.constant dense<0.000000e+00> : vector<2x64xf32>
    %69 = tpu.matmul %66, %1, %cst_44 {dimension_numbers = #tpu.dot_dimension_numbers<[1], [0], [0], [1], [0, 0, 1, 1], [], []>} : vector<2x64xf32>, vector<64x64xf32>, vector<2x64xf32> -> vector<2x64xf32>
    %70 = arith.addf %68, %69 : vector<2x64xf32>
    %71 = math.tanh %70 : vector<2x64xf32>
    %c4_45 = arith.constant 4 : index
    %c0_46 = arith.constant 0 : index
    %72 = vector.load %arg14[%c4_45, %c0_46] : memref<16x64xf32, #tpu.memory_space<vmem>>, vector<2x64xf32>
    tpu.vector_store %arg14[%c4_45, %c0_46], %71 {strides = array<i32>} : memref<16x64xf32, #tpu.memory_space<vmem>>, vector<2x64xf32>,
    %73 = vector.extract_strided_slice %55 {offsets = [6, 0], sizes = [2, 64], strides = [1, 1]} : vector<16x64xf32> to vector<2x64xf32>
    %cst_47 = arith.constant dense<0.000000e+00> : vector<2x64xf32>
    %74 = tpu.matmul %71, %1, %cst_47 {dimension_numbers = #tpu.dot_dimension_numbers<[1], [0], [0], [1], [0, 0, 1, 1], [], []>} : vector<2x64xf32>, vector<64x64xf32>, vector<2x64xf32> -> vector<2x64xf32>
    %75 = arith.addf %73, %74 : vector<2x64xf32>
    %76 = math.tanh %75 : vector<2x64xf32>
    %c6_48 = arith.constant 6 : index
    %c0_49 = arith.constant 0 : index
    %77 = vector.load %arg14[%c6_48, %c0_49] : memref<16x64xf32, #tpu.memory_space<vmem>>, vector<2x64xf32>
    tpu.vector_store %arg14[%c6_48, %c0_49], %76 {strides = array<i32>} : memref<16x64xf32, #tpu.memory_space<vmem>>, vector<2x64xf32>,
    %78 = vector.extract_strided_slice %55 {offsets = [8, 0], sizes = [2, 64], strides = [1, 1]} : vector<16x64xf32> to vector<2x64xf32>
    %cst_50 = arith.constant dense<0.000000e+00> : vector<2x64xf32>
    %79 = tpu.matmul %76, %1, %cst_50 {dimension_numbers = #tpu.dot_dimension_numbers<[1], [0], [0], [1], [0, 0, 1, 1], [], []>} : vector<2x64xf32>, vector<64x64xf32>, vector<2x64xf32> -> vector<2x64xf32>
    %80 = arith.addf %78, %79 : vector<2x64xf32>
    %81 = math.tanh %80 : vector<2x64xf32>
    %c8_51 = arith.constant 8 : index
    %c0_52 = arith.constant 0 : index
    %82 = vector.load %arg14[%c8_51, %c0_52] : memref<16x64xf32, #tpu.memory_space<vmem>>, vector<2x64xf32>
    tpu.vector_store %arg14[%c8_51, %c0_52], %81 {strides = array<i32>} : memref<16x64xf32, #tpu.memory_space<vmem>>, vector<2x64xf32>,
    %83 = vector.extract_strided_slice %55 {offsets = [10, 0], sizes = [2, 64], strides = [1, 1]} : vector<16x64xf32> to vector<2x64xf32>
    %cst_53 = arith.constant dense<0.000000e+00> : vector<2x64xf32>
    %84 = tpu.matmul %81, %1, %cst_53 {dimension_numbers = #tpu.dot_dimension_numbers<[1], [0], [0], [1], [0, 0, 1, 1], [], []>} : vector<2x64xf32>, vector<64x64xf32>, vector<2x64xf32> -> vector<2x64xf32>
    %85 = arith.addf %83, %84 : vector<2x64xf32>
    %86 = math.tanh %85 : vector<2x64xf32>
    %c10_54 = arith.constant 10 : index
    %c0_55 = arith.constant 0 : index
    %87 = vector.load %arg14[%c10_54, %c0_55] : memref<16x64xf32, #tpu.memory_space<vmem>>, vector<2x64xf32>
    tpu.vector_store %arg14[%c10_54, %c0_55], %86 {strides = array<i32>} : memref<16x64xf32, #tpu.memory_space<vmem>>, vector<2x64xf32>,
    %88 = vector.extract_strided_slice %55 {offsets = [12, 0], sizes = [2, 64], strides = [1, 1]} : vector<16x64xf32> to vector<2x64xf32>
    %cst_56 = arith.constant dense<0.000000e+00> : vector<2x64xf32>
    %89 = tpu.matmul %86, %1, %cst_56 {dimension_numbers = #tpu.dot_dimension_numbers<[1], [0], [0], [1], [0, 0, 1, 1], [], []>} : vector<2x64xf32>, vector<64x64xf32>, vector<2x64xf32> -> vector<2x64xf32>
    %90 = arith.addf %88, %89 : vector<2x64xf32>
    %91 = math.tanh %90 : vector<2x64xf32>
    %c12_57 = arith.constant 12 : index
    %c0_58 = arith.constant 0 : index
    %92 = vector.load %arg14[%c12_57, %c0_58] : memref<16x64xf32, #tpu.memory_space<vmem>>, vector<2x64xf32>
    tpu.vector_store %arg14[%c12_57, %c0_58], %91 {strides = array<i32>} : memref<16x64xf32, #tpu.memory_space<vmem>>, vector<2x64xf32>,
    %93 = vector.extract_strided_slice %55 {offsets = [14, 0], sizes = [2, 64], strides = [1, 1]} : vector<16x64xf32> to vector<2x64xf32>
    %cst_59 = arith.constant dense<0.000000e+00> : vector<2x64xf32>
    %94 = tpu.matmul %91, %1, %cst_59 {dimension_numbers = #tpu.dot_dimension_numbers<[1], [0], [0], [1], [0, 0, 1, 1], [], []>} : vector<2x64xf32>, vector<64x64xf32>, vector<2x64xf32> -> vector<2x64xf32>
    %95 = arith.addf %93, %94 : vector<2x64xf32>
    %96 = math.tanh %95 : vector<2x64xf32>
    %c14_60 = arith.constant 14 : index
    %c0_61 = arith.constant 0 : index
    %97 = vector.load %arg14[%c14_60, %c0_61] : memref<16x64xf32, #tpu.memory_space<vmem>>, vector<2x64xf32>
    tpu.vector_store %arg14[%c14_60, %c0_61], %96 {strides = array<i32>} : memref<16x64xf32, #tpu.memory_space<vmem>>, vector<2x64xf32>,
    %c0_62 = arith.constant 0 : index
    %c0_63 = arith.constant 0 : index
    %98 = vector.load %arg14[%c0_62, %c0_63] : memref<16x64xf32, #tpu.memory_space<vmem>>, vector<16x64xf32>
    %c0_64 = arith.constant 0 : index
    %c0_65 = arith.constant 0 : index
    %99 = vector.load %arg9[%c0_64, %c0_65] : memref<64x32xf32, #tpu.memory_space<vmem>>, vector<64x32xf32>
    %cst_66 = arith.constant dense<0.000000e+00> : vector<16x32xf32>
    %100 = tpu.matmul %98, %99, %cst_66 {dimension_numbers = #tpu.dot_dimension_numbers<[1], [0], [0], [1], [0, 0, 1, 1], [], []>} : vector<16x64xf32>, vector<64x32xf32>, vector<16x32xf32> -> vector<16x32xf32>
    %c0_67 = arith.constant 0 : index
    %c0_68 = arith.constant 0 : index
    %101 = vector.load %arg10[%c0_67, %c0_68] : memref<1x32xf32, #tpu.memory_space<vmem>>, vector<1x32xf32>
    %102 = vector.broadcast %101 : vector<1x32xf32> to vector<16x32xf32>
    %103 = arith.addf %100, %102 : vector<16x32xf32>
    %c0_69 = arith.constant 0 : index
    %c0_70 = arith.constant 0 : index
    %104 = vector.load %arg11[%c0_69, %c0_70] : memref<16x32xf32, #tpu.memory_space<vmem>>, vector<16x32xf32>
    tpu.vector_store %arg11[%c0_69, %c0_70], %103 {strides = array<i32>} : memref<16x32xf32, #tpu.memory_space<vmem>>, vector<16x32xf32>,
    %c0_71 = arith.constant 0 : index
    %c0_72 = arith.constant 0 : index
    %c0_73 = arith.constant 0 : index
    %105 = vector.load %arg12[%c0_71, %c0_72, %c0_73] : memref<2x2x64xf32, #tpu.memory_space<vmem>>, vector<1x2x64xf32>
    %106 = vector.shape_cast %105 : vector<1x2x64xf32> to vector<2x64xf32>
    %107 = vector.shape_cast %48 : vector<2x64xf32> to vector<1x2x64xf32>
    tpu.vector_store %arg12[%c0_71, %c0_72, %c0_73], %107 {strides = array<i32>} : memref<2x2x64xf32, #tpu.memory_space<vmem>>, vector<1x2x64xf32>,
    %c1_74 = arith.constant 1 : index
    %c0_75 = arith.constant 0 : index
    %c0_76 = arith.constant 0 : index
    %108 = vector.load %arg12[%c1_74, %c0_75, %c0_76] : memref<2x2x64xf32, #tpu.memory_space<vmem>>, vector<1x2x64xf32>
    %109 = vector.shape_cast %108 : vector<1x2x64xf32> to vector<2x64xf32>
    %110 = vector.shape_cast %96 : vector<2x64xf32> to vector<1x2x64xf32>
    tpu.vector_store %arg12[%c1_74, %c0_75, %c0_76], %110 {strides = array<i32>} : memref<2x2x64xf32, #tpu.memory_space<vmem>>, vector<1x2x64xf32>,
    return
  }
  func.func @transform_0(%arg0: i32) -> (i32, i32) {
    %c0_i32 = arith.constant 0 : i32
    %c0_i32_0 = arith.constant 0 : i32
    %c0_i32_1 = arith.constant 0 : i32
    return %c0_i32, %c0_i32_0 : i32, i32
  }
  func.func @transform_1(%arg0: i32) -> (i32, i32, i32) {
    %c0_i32 = arith.constant 0 : i32
    %c0_i32_0 = arith.constant 0 : i32
    %c0_i32_1 = arith.constant 0 : i32
    %c0_i32_2 = arith.constant 0 : i32
    return %c0_i32, %c0_i32_0, %c0_i32_1 : i32, i32, i32
  }
  func.func @transform_2(%arg0: i32) -> (i32, i32) {
    %c0_i32 = arith.constant 0 : i32
    %c0_i32_0 = arith.constant 0 : i32
    %c0_i32_1 = arith.constant 0 : i32
    return %c0_i32, %c0_i32_0 : i32, i32
  }
  func.func @transform_3(%arg0: i32) -> (i32, i32) {
    %c0_i32 = arith.constant 0 : i32
    %c0_i32_0 = arith.constant 0 : i32
    %c0_i32_1 = arith.constant 0 : i32
    return %c0_i32, %c0_i32_0 : i32, i32
  }
  func.func @transform_4(%arg0: i32) -> (i32, i32) {
    %c0_i32 = arith.constant 0 : i32
    %c0_i32_0 = arith.constant 0 : i32
    %c0_i32_1 = arith.constant 0 : i32
    return %c0_i32, %c0_i32_0 : i32, i32
  }
  func.func @transform_5(%arg0: i32) -> (i32, i32) {
    %c0_i32 = arith.constant 0 : i32
    %c0_i32_0 = arith.constant 0 : i32
    %c0_i32_1 = arith.constant 0 : i32
    return %c0_i32, %c0_i32_0 : i32, i32
  }
  func.func @transform_6(%arg0: i32) -> (i32, i32) {
    %c0_i32 = arith.constant 0 : i32
    %c0_i32_0 = arith.constant 0 : i32
    %c0_i32_1 = arith.constant 0 : i32
    return %c0_i32, %c0_i32_0 : i32, i32
  }
  func.func @transform_7(%arg0: i32) -> (i32, i32) {
    %c0_i32 = arith.constant 0 : i32
    %c0_i32_0 = arith.constant 0 : i32
    %c0_i32_1 = arith.constant 0 : i32
    return %c0_i32, %c0_i32_0 : i32, i32
  }
  func.func @transform_8(%arg0: i32) -> (i32, i32) {
    %c0_i32 = arith.constant 0 : i32
    %c0_i32_0 = arith.constant 0 : i32
    %c0_i32_1 = arith.constant 0 : i32
    return %c0_i32, %c0_i32_0 : i32, i32
  }
  func.func @transform_9(%arg0: i32) -> (i32, i32) {
    %c0_i32 = arith.constant 0 : i32
    %c0_i32_0 = arith.constant 0 : i32
    %c0_i32_1 = arith.constant 0 : i32
    return %c0_i32, %c0_i32_0 : i32, i32
  }
  func.func @transform_10(%arg0: i32) -> (i32, i32) {
    %c0_i32 = arith.constant 0 : i32
    %c0_i32_0 = arith.constant 0 : i32
    %c0_i32_1 = arith.constant 0 : i32
    return %c0_i32, %c0_i32_0 : i32, i32
  }
  func.func @transform_11(%arg0: i32) -> (i32, i32, i32) {
    %c0_i32 = arith.constant 0 : i32
    %c0_i32_0 = arith.constant 0 : i32
    %c0_i32_1 = arith.constant 0 : i32
    %c0_i32_2 = arith.constant 0 : i32
    return %c0_i32, %c0_i32_0, %c0_i32_1 : i32, i32, i32
  }
}

</mosaic_0001>

<llo_original>
// kernel: rnn_model_forward.1
$region0: #{rnn_model_forward.1}
  #allocation0 [shape = 'u32[]', space=smem, size = 0x4, offset = 0x4, fixed_abs, tag = 'smem constant byte address 0x4 - core index']
  #allocation1 [shape = 'u32[144,128]{1,0:T(1,128)}', space=vmem, size = 0x12000, scoped, tag = 'internal scratch']
  #allocation2 [shape = 'f32[16,64]{1,0:T(8,128)}', space=vmem, size = 0x2000, scoped, tag = 'scratch operand']
  #allocation3 [shape = 'f32[16,64]{1,0:T(8,128)}', space=vmem, size = 0x2000, scoped, tag = 'scratch operand']
  %s0 = inlined_call_operand.vmem [shape: f32[16,32], index: 0, kind: input, shape index: {}]
  %s1 = inlined_call_operand.vmem [shape: f32[2,2,64], index: 1, kind: input, shape index: {}]
  %s2 = inlined_call_operand.hbm [shape: f32[32,64], index: 2, kind: input, shape index: {}]
  %s3 = inlined_call_operand.vmem [shape: f32[64,64], index: 3, kind: input, shape index: {}]
  %s4 = inlined_call_operand.vmem [shape: f32[64,64], index: 4, kind: input, shape index: {}]
  %s5 = inlined_call_operand.hbm [shape: f32[64,64], index: 5, kind: input, shape index: {}]
  %s6 = inlined_call_operand.vmem [shape: f32[1,64], index: 6, kind: input, shape index: {}]
  %s7 = inlined_call_operand.vmem [shape: f32[1,64], index: 7, kind: input, shape index: {}]
  %s8 = inlined_call_operand.vmem [shape: f32[64,32], index: 8, kind: input, shape index: {}]
  %s9 = inlined_call_operand.vmem [shape: f32[1,32], index: 9, kind: input, shape index: {}]
  %s10 = inlined_call_operand.vmem [shape: f32[16,32], index: 10, kind: output, shape index: {0}]
  %s11 = inlined_call_operand.hbm [shape: f32[2,2,64], index: 11, kind: output, shape index: {1}]
  %12 = xla_tuple %s10, %s11
  %s13 = sld [smem:[#allocation0]]
  $region66: #{rnn_model_forward.1} parent=0
    _
  %s15 = ssub.s32 1, %s13
  %s16 = scalar_select 0, %s15, %s13
  $region1: #{rnn_model_forward.1} parent=0
    #allocation4 [shape = 'u8[16384]{0}', space=vmem, size = 0x4000, scoped, tag = 'input window, operand 2, single buffered']
    #allocation5 [shape = 's32[1]{0}', space=sflag, size = 0x4, scoped, tag = 'scoped memory for rnn_model_forward.1']
    #allocation6 [shape = 's32[1]{0}', space=sflag, size = 0x4, scoped, tag = 'scoped memory for rnn_model_forward.1']
    #allocation7 [shape = 'u8[32768]{0}', space=vmem, size = 0x8000, scoped, tag = 'input window, operand 5, single buffered']
    #allocation8 [shape = 's32[1]{0}', space=sflag, size = 0x4, scoped, tag = 'scoped memory for rnn_model_forward.1']
    #allocation9 [shape = 'u8[2048]{0}', space=vmem, size = 0x800, scoped, tag = 'output window, operand 1, single buffered']
    %17 = vsyncpa [#allocation5], 0
    %18 = vsyncpa [#allocation8], 0
    %19 = vsyncpa [#allocation6], 0
    // Predicated region
    $region2: #{rnn_model_forward.1} parent=1 // pred_check
      _
    $region3: #{rnn_model_forward.1} parent=1 // pred_check_branch
      %21 = sbr.rel (0) target = $region5
    $region4: #{rnn_model_forward.1} parent=1 // pred_region
      _
    $region5: #{rnn_model_forward.1} parent=1 // pred_fallthru
      _
    // Predicated region
    $region6: #{rnn_model_forward.1} parent=1 // pred_check
      _
    $region7: #{rnn_model_forward.1} parent=1 // pred_check_branch
      %23 = sbr.rel (0) target = $region9
    $region8: #{rnn_model_forward.1} parent=1 // pred_region
      _
    $region9: #{rnn_model_forward.1} parent=1 // pred_fallthru
      _
    // Predicated region
    $region10: #{rnn_model_forward.1} parent=1 // pred_check
      _
    $region11: #{rnn_model_forward.1} parent=1 // pred_check_branch
      %25 = sbr.rel (0) target = $region13
    $region12: #{rnn_model_forward.1} parent=1 // pred_region
      %s27 = ssub.s32 512, 512
      %28 = vsyncadd [#allocation5], %s27
      %s29 = sshll.u32 [#allocation4], 4
      %s30 = int_to_ptr.vmem [resolvable:$true] %s29
      %35 = dma.hbm_to_vmem [thread:$0]  %s2, 512, %s30, [#allocation5], 128, 128, 8
    $region13: #{rnn_model_forward.1} parent=1 // pred_fallthru
      _
    // Predicated region
    $region14: #{rnn_model_forward.1} parent=1 // pred_check
      _
    $region15: #{rnn_model_forward.1} parent=1 // pred_check_branch
      %37 = sbr.rel (0) target = $region17
    $region16: #{rnn_model_forward.1} parent=1 // pred_region
      _
    $region17: #{rnn_model_forward.1} parent=1 // pred_fallthru
      _
    // Predicated region
    $region18: #{rnn_model_forward.1} parent=1 // pred_check
      _
    $region19: #{rnn_model_forward.1} parent=1 // pred_check_branch
      %39 = sbr.rel (0) target = $region21
    $region20: #{rnn_model_forward.1} parent=1 // pred_region
      _
    $region21: #{rnn_model_forward.1} parent=1 // pred_fallthru
      _
    // Predicated region
    $region22: #{rnn_model_forward.1} parent=1 // pred_check
      _
    $region23: #{rnn_model_forward.1} parent=1 // pred_check_branch
      %41 = sbr.rel (0) target = $region25
    $region24: #{rnn_model_forward.1} parent=1 // pred_region
      %s43 = ssub.s32 1024, 1024
      %44 = vsyncadd [#allocation8], %s43
      %s45 = sshll.u32 [#allocation7], 4
      %s46 = int_to_ptr.vmem [resolvable:$true] %s45
      %51 = dma.hbm_to_vmem [thread:$0]  %s5, 1024, %s46, [#allocation8], 128, 128, 8
    $region25: #{rnn_model_forward.1} parent=1 // pred_fallthru
      _
    // Predicated region
    $region26: #{rnn_model_forward.1} parent=1 // pred_check
      _
    $region27: #{rnn_model_forward.1} parent=1 // pred_check_branch
      %53 = sbr.rel (0) target = $region29
    $region28: #{rnn_model_forward.1} parent=1 // pred_region
      _
    $region29: #{rnn_model_forward.1} parent=1 // pred_fallthru
      _
    // Predicated region
    $region30: #{rnn_model_forward.1} parent=1 // pred_check
      _
    $region31: #{rnn_model_forward.1} parent=1 // pred_check_branch
      %55 = sbr.rel (0) target = $region33
    $region32: #{rnn_model_forward.1} parent=1 // pred_region
      _
    $region33: #{rnn_model_forward.1} parent=1 // pred_fallthru
      _
    // Predicated region
    $region34: #{rnn_model_forward.1} parent=1 // pred_check
      _
    $region35: #{rnn_model_forward.1} parent=1 // pred_check_branch
      %57 = sbr.rel (0) target = $region37
    $region36: #{rnn_model_forward.1} parent=1 // pred_region
      _
    $region37: #{rnn_model_forward.1} parent=1 // pred_fallthru
      _
    // Predicated region
    $region38: #{rnn_model_forward.1} parent=1 // pred_check
      _
    $region39: #{rnn_model_forward.1} parent=1 // pred_check_branch
      %59 = sbr.rel (0) target = $region41
    $region40: #{rnn_model_forward.1} parent=1 // pred_region
      _
    $region41: #{rnn_model_forward.1} parent=1 // pred_fallthru
      _
    // Predicated region
    $region42: #{rnn_model_forward.1} parent=1 // pred_check
      _
    $region43: #{rnn_model_forward.1} parent=1 // pred_check_branch
      %61 = sbr.rel (0) target = $region45
    $region44: #{rnn_model_forward.1} parent=1 // pred_region
      %62 = dma.done [#allocation5], 512
    $region45: #{rnn_model_forward.1} parent=1 // pred_fallthru
      _
    // Predicated region
    $region46: #{rnn_model_forward.1} parent=1 // pred_check
      _
    $region47: #{rnn_model_forward.1} parent=1 // pred_check_branch
      %64 = sbr.rel (0) target = $region49
    $region48: #{rnn_model_forward.1} parent=1 // pred_region
      %65 = dma.done [#allocation8], 1024
    $region49: #{rnn_model_forward.1} parent=1 // pred_fallthru
      _
    %v66 = vld [vmem:[%s3] sm:$0xff]
    %v67 = vld [vmem:[%s3 + $0x8] sm:$0xff]
    %v68 = vld [vmem:[%s3 + $0x10] sm:$0xff]
    %v69 = vld [vmem:[%s3 + $0x18] sm:$0xff]
    %v70 = vld [vmem:[%s3 + $0x20] sm:$0xff]
    %v71 = vld [vmem:[%s3 + $0x28] sm:$0xff]
    %v72 = vld [vmem:[%s3 + $0x30] sm:$0xff]
    %v73 = vld [vmem:[%s3 + $0x38] sm:$0xff]
    %v74 = vld [vmem:[#allocation7] sm:$0xff]
    %v75 = vld [vmem:[#allocation7 + $0x8] sm:$0xff]
    %v76 = vld [vmem:[#allocation7 + $0x10] sm:$0xff]
    %v77 = vld [vmem:[#allocation7 + $0x18] sm:$0xff]
    %v78 = vld [vmem:[#allocation7 + $0x20] sm:$0xff]
    %v79 = vld [vmem:[#allocation7 + $0x28] sm:$0xff]
    %v80 = vld [vmem:[#allocation7 + $0x30] sm:$0xff]
    %v81 = vld [vmem:[#allocation7 + $0x38] sm:$0xff]
    %v82 = vld [vmem:[%s0] sm:$0xff]
    %v83 = vld [vmem:[%s0 + $0x8] sm:$0xff]
    %v84 = vld [vmem:[#allocation4] sm:$0xff]
    %v85 = vld [vmem:[#allocation4 + $0x8] sm:$0xff]
    %v86 = vld [vmem:[#allocation4 + $0x10] sm:$0xff]
    %v87 = vld [vmem:[#allocation4 + $0x18] sm:$0xff]
    %v88 = vld [vmem:[%s6] sm:$0x1]
    %v90 = vlaneseq
    %v91 = vshrl.u32 %v90, 7
    %v92 = vsub.s32 0, %v91
    %v93 = vrot.slane %v88, %v92
    %vm95 = vcmask 261120
    %v97 = vsel %vm95, %v82, 0
    %v100 = vsel %vm95, %v83, 0
    %102 = vmatprep.subr.mxu0 0.0
    %103 = vmatpush1.msra.mxu0 0.0
    %104 = vmatprep.subr.mxu0 0.0
    %105 = vmatpush1.msra.mxu0 0.0
    %106 = vmatprep.subr.mxu0 0.0
    %107 = vmatpush1.msra.mxu0 0.0
    %108 = vmatprep.subr.mxu0 0.0
    %109 = vmatpush1.msra.mxu0 0.0
    %110 = vmatprep.subr.mxu0 0.0
    %111 = vmatpush1.msra.mxu0 0.0
    %112 = vmatprep.subr.mxu0 0.0
    %113 = vmatpush1.msra.mxu0 0.0
    %114 = vmatprep.subr.mxu0 0.0
    %115 = vmatpush1.msra.mxu0 0.0
    %116 = vmatprep.subr.mxu0 0.0
    %117 = vmatpush1.msra.mxu0 0.0
    %118 = vmatprep.subr.mxu0 0.0
    %119 = vmatpush1.msra.mxu0 0.0
    %120 = vmatprep.subr.mxu0 0.0
    %121 = vmatpush1.msra.mxu0 0.0
    %122 = vmatprep.subr.mxu0 0.0
    %123 = vmatpush1.msra.mxu0 0.0
    %124 = vmatprep.subr.mxu0 0.0
    %125 = vmatpush1.msra.mxu0 0.0
    %126 = vmatprep.subr.mxu0 0.0
    %127 = vmatpush1.msra.mxu0 %v87
    %128 = vmatprep.subr.mxu0 0.0
    %129 = vmatpush1.msra.mxu0 %v86
    %130 = vmatprep.subr.mxu0 0.0
    %131 = vmatpush1.msra.mxu0 %v85
    %132 = vmatprep.subr.mxu0 0.0
    %133 = vmatpush1.msra.mxu0 %v84
    %134 = vmatprep.subr.mxu0 0.0
    %135 = vmatpush2.msra.mxu0 0.0
    %136 = vmatprep.subr.mxu0 0.0
    %137 = vmatpush2.msra.mxu0 0.0
    %138 = vmatprep.subr.mxu0 0.0
    %139 = vmatpush2.msra.mxu0 0.0
    %140 = vmatprep.subr.mxu0 0.0
    %141 = vmatpush2.msra.mxu0 0.0
    %142 = vmatprep.subr.mxu0 0.0
    %143 = vmatpush2.msra.mxu0 0.0
    %144 = vmatprep.subr.mxu0 0.0
    %145 = vmatpush2.msra.mxu0 0.0
    %146 = vmatprep.subr.mxu0 0.0
    %147 = vmatpush2.msra.mxu0 0.0
    %148 = vmatprep.subr.mxu0 0.0
    %149 = vmatpush2.msra.mxu0 0.0
    %150 = vmatprep.subr.mxu0 0.0
    %151 = vmatpush2.msra.mxu0 0.0
    %152 = vmatprep.subr.mxu0 0.0
    %153 = vmatpush2.msra.mxu0 0.0
    %154 = vmatprep.subr.mxu0 0.0
    %155 = vmatpush2.msra.mxu0 0.0
    %156 = vmatprep.subr.mxu0 0.0
    %157 = vmatpush2.msra.mxu0 0.0
    %158 = vmatprep.subr.mxu0 0.0
    %159 = vmatpush2.msra.mxu0 0.0
    %160 = vmatprep.subr.mxu0 0.0
    %161 = vmatpush2.msra.mxu0 0.0
    %162 = vmatprep.subr.mxu0 0.0
    %163 = vmatpush2.msra.mxu0 0.0
    %164 = vmatprep.subr.mxu0 0.0
    %165 = vmatpush2.msra.mxu0 0.0
    %166 = vmatprep.mubr.f32.mxu0 0.0
    %167 = vmatmul.mubr.f32.gmra.mxu0 %v97
    %v168 = vpop.f32.mrf.mxu0
    %v169 = vadd.f32 %v93, %v168
    %v170 = vpop.f32.mrf.mxu0
    %171 = vmatprep.mubr.f32.mxu0 0.0
    %172 = vmatmul.mubr.f32.gmra.mxu0 %v100
    %v173 = vpop.f32.mrf.mxu0
    %v174 = vadd.f32 %v93, %v173
    %v175 = vpop.f32.mrf.mxu0
    %176 = vdwg.mxu0
    %v177 = vld [vmem:[%s1] sm:$0x3]
    %vm178 = vcmask 523264
    %v180 = vsel %vm178, %v177, 0
    %182 = vmatprep.subr.mxu0 0.0
    %183 = vmatpush1.msra.mxu0 0.0
    %184 = vmatprep.subr.mxu0 0.0
    %185 = vmatpush1.msra.mxu0 0.0
    %186 = vmatprep.subr.mxu0 0.0
    %187 = vmatpush1.msra.mxu0 0.0
    %188 = vmatprep.subr.mxu0 0.0
    %189 = vmatpush1.msra.mxu0 0.0
    %190 = vmatprep.subr.mxu0 0.0
    %191 = vmatpush1.msra.mxu0 0.0
    %192 = vmatprep.subr.mxu0 0.0
    %193 = vmatpush1.msra.mxu0 0.0
    %194 = vmatprep.subr.mxu0 0.0
    %195 = vmatpush1.msra.mxu0 0.0
    %196 = vmatprep.subr.mxu0 0.0
    %197 = vmatpush1.msra.mxu0 0.0
    %198 = vmatprep.subr.mxu0 0.0
    %199 = vmatpush1.msra.mxu0 %v73
    %200 = vmatprep.subr.mxu0 0.0
    %201 = vmatpush1.msra.mxu0 %v72
    %202 = vmatprep.subr.mxu0 0.0
    %203 = vmatpush1.msra.mxu0 %v71
    %204 = vmatprep.subr.mxu0 0.0
    %205 = vmatpush1.msra.mxu0 %v70
    %206 = vmatprep.subr.mxu0 0.0
    %207 = vmatpush1.msra.mxu0 %v69
    %208 = vmatprep.subr.mxu0 0.0
    %209 = vmatpush1.msra.mxu0 %v68
    %210 = vmatprep.subr.mxu0 0.0
    %211 = vmatpush1.msra.mxu0 %v67
    %212 = vmatprep.subr.mxu0 0.0
    %213 = vmatpush1.msra.mxu0 %v66
    %214 = vmatprep.subr.mxu0 0.0
    %215 = vmatpush2.msra.mxu0 0.0
    %216 = vmatprep.subr.mxu0 0.0
    %217 = vmatpush2.msra.mxu0 0.0
    %218 = vmatprep.subr.mxu0 0.0
    %219 = vmatpush2.msra.mxu0 0.0
    %220 = vmatprep.subr.mxu0 0.0
    %221 = vmatpush2.msra.mxu0 0.0
    %222 = vmatprep.subr.mxu0 0.0
    %223 = vmatpush2.msra.mxu0 0.0
    %224 = vmatprep.subr.mxu0 0.0
    %225 = vmatpush2.msra.mxu0 0.0
    %226 = vmatprep.subr.mxu0 0.0
    %227 = vmatpush2.msra.mxu0 0.0
    %228 = vmatprep.subr.mxu0 0.0
    %229 = vmatpush2.msra.mxu0 0.0
    %230 = vmatprep.subr.mxu0 0.0
    %231 = vmatpush2.msra.mxu0 0.0
    %232 = vmatprep.subr.mxu0 0.0
    %233 = vmatpush2.msra.mxu0 0.0
    %234 = vmatprep.subr.mxu0 0.0
    %235 = vmatpush2.msra.mxu0 0.0
    %236 = vmatprep.subr.mxu0 0.0
    %237 = vmatpush2.msra.mxu0 0.0
    %238 = vmatprep.subr.mxu0 0.0
    %239 = vmatpush2.msra.mxu0 0.0
    %240 = vmatprep.subr.mxu0 0.0
    %241 = vmatpush2.msra.mxu0 0.0
    %242 = vmatprep.subr.mxu0 0.0
    %243 = vmatpush2.msra.mxu0 0.0
    %244 = vmatprep.subr.mxu0 0.0
    %245 = vmatpush2.msra.mxu0 0.0
    %246 = vmatprep.mubr.f32.mxu0 0.0
    %247 = vmatmul.mubr.f32.gmra.mxu0 %v180
    %v248 = vpop.f32.mrf.mxu0
    %v249 = vadd.f32 0.0, %v248
    %v250 = vpop.f32.mrf.mxu0
    %251 = vdwg.mxu0
    %v252 = vadd.f32 %v169, %v249
    %v253 = vtanh.pop %v252
    %vm254 = vcmask 517120
    %255 = vst.msk [vmem:[#allocation2] sm:$0x3] %vm254, %v253
    %v257 = vsel %vm178, %v253, 0
    %259 = vmatprep.subr.mxu0 0.0
    %260 = vmatpush1.msra.mxu0 0.0
    %261 = vmatprep.subr.mxu0 0.0
    %262 = vmatpush1.msra.mxu0 0.0
    %263 = vmatprep.subr.mxu0 0.0
    %264 = vmatpush1.msra.mxu0 0.0
    %265 = vmatprep.subr.mxu0 0.0
    %266 = vmatpush1.msra.mxu0 0.0
    %267 = vmatprep.subr.mxu0 0.0
    %268 = vmatpush1.msra.mxu0 0.0
    %269 = vmatprep.subr.mxu0 0.0
    %270 = vmatpush1.msra.mxu0 0.0
    %271 = vmatprep.subr.mxu0 0.0
    %272 = vmatpush1.msra.mxu0 0.0
    %273 = vmatprep.subr.mxu0 0.0
    %274 = vmatpush1.msra.mxu0 0.0
    %275 = vmatprep.subr.mxu0 0.0
    %276 = vmatpush1.msra.mxu0 %v73
    %277 = vmatprep.subr.mxu0 0.0
    %278 = vmatpush1.msra.mxu0 %v72
    %279 = vmatprep.subr.mxu0 0.0
    %280 = vmatpush1.msra.mxu0 %v71
    %281 = vmatprep.subr.mxu0 0.0
    %282 = vmatpush1.msra.mxu0 %v70
    %283 = vmatprep.subr.mxu0 0.0
    %284 = vmatpush1.msra.mxu0 %v69
    %285 = vmatprep.subr.mxu0 0.0
    %286 = vmatpush1.msra.mxu0 %v68
    %287 = vmatprep.subr.mxu0 0.0
    %288 = vmatpush1.msra.mxu0 %v67
    %289 = vmatprep.subr.mxu0 0.0
    %290 = vmatpush1.msra.mxu0 %v66
    %291 = vmatprep.subr.mxu0 0.0
    %292 = vmatpush2.msra.mxu0 0.0
    %293 = vmatprep.subr.mxu0 0.0
    %294 = vmatpush2.msra.mxu0 0.0
    %295 = vmatprep.subr.mxu0 0.0
    %296 = vmatpush2.msra.mxu0 0.0
    %297 = vmatprep.subr.mxu0 0.0
    %298 = vmatpush2.msra.mxu0 0.0
    %299 = vmatprep.subr.mxu0 0.0
    %300 = vmatpush2.msra.mxu0 0.0
    %301 = vmatprep.subr.mxu0 0.0
    %302 = vmatpush2.msra.mxu0 0.0
    %303 = vmatprep.subr.mxu0 0.0
    %304 = vmatpush2.msra.mxu0 0.0
    %305 = vmatprep.subr.mxu0 0.0
    %306 = vmatpush2.msra.mxu0 0.0
    %307 = vmatprep.subr.mxu0 0.0
    %308 = vmatpush2.msra.mxu0 0.0
    %309 = vmatprep.subr.mxu0 0.0
    %310 = vmatpush2.msra.mxu0 0.0
    %311 = vmatprep.subr.mxu0 0.0
    %312 = vmatpush2.msra.mxu0 0.0
    %313 = vmatprep.subr.mxu0 0.0
    %314 = vmatpush2.msra.mxu0 0.0
    %315 = vmatprep.subr.mxu0 0.0
    %316 = vmatpush2.msra.mxu0 0.0
    %317 = vmatprep.subr.mxu0 0.0
    %318 = vmatpush2.msra.mxu0 0.0
    %319 = vmatprep.subr.mxu0 0.0
    %320 = vmatpush2.msra.mxu0 0.0
    %321 = vmatprep.subr.mxu0 0.0
    %322 = vmatpush2.msra.mxu0 0.0
    %323 = vmatprep.mubr.f32.mxu0 0.0
    %324 = vmatmul.mubr.f32.gmra.mxu0 %v257
    %v325 = vpop.f32.mrf.mxu0
    %v326 = vadd.f32 0.0, %v325
    %v327 = vpop.f32.mrf.mxu0
    %328 = vdwg.mxu0
    %v330 = vrot.slane %v326, 6
    %v332 = vadd.f32 %v169, %v330
    %v333 = vtanh.pop %v332
    %vm334 = vcmask 519170
    %335 = vst.msk [vmem:[#allocation2] sm:$0xc] %vm334, %v333
    %v337 = vrot.slane %v333, 2
    %v338 = vsel %vm178, %v337, 0
    %340 = vmatprep.subr.mxu0 0.0
    %341 = vmatpush1.msra.mxu0 0.0
    %342 = vmatprep.subr.mxu0 0.0
    %343 = vmatpush1.msra.mxu0 0.0
    %344 = vmatprep.subr.mxu0 0.0
    %345 = vmatpush1.msra.mxu0 0.0
    %346 = vmatprep.subr.mxu0 0.0
    %347 = vmatpush1.msra.mxu0 0.0
    %348 = vmatprep.subr.mxu0 0.0
    %349 = vmatpush1.msra.mxu0 0.0
    %350 = vmatprep.subr.mxu0 0.0
    %351 = vmatpush1.msra.mxu0 0.0
    %352 = vmatprep.subr.mxu0 0.0
    %353 = vmatpush1.msra.mxu0 0.0
    %354 = vmatprep.subr.mxu0 0.0
    %355 = vmatpush1.msra.mxu0 0.0
    %356 = vmatprep.subr.mxu0 0.0
    %357 = vmatpush1.msra.mxu0 %v73
    %358 = vmatprep.subr.mxu0 0.0
    %359 = vmatpush1.msra.mxu0 %v72
    %360 = vmatprep.subr.mxu0 0.0
    %361 = vmatpush1.msra.mxu0 %v71
    %362 = vmatprep.subr.mxu0 0.0
    %363 = vmatpush1.msra.mxu0 %v70
    %364 = vmatprep.subr.mxu0 0.0
    %365 = vmatpush1.msra.mxu0 %v69
    %366 = vmatprep.subr.mxu0 0.0
    %367 = vmatpush1.msra.mxu0 %v68
    %368 = vmatprep.subr.mxu0 0.0
    %369 = vmatpush1.msra.mxu0 %v67
    %370 = vmatprep.subr.mxu0 0.0
    %371 = vmatpush1.msra.mxu0 %v66
    %372 = vmatprep.subr.mxu0 0.0
    %373 = vmatpush2.msra.mxu0 0.0
    %374 = vmatprep.subr.mxu0 0.0
    %375 = vmatpush2.msra.mxu0 0.0
    %376 = vmatprep.subr.mxu0 0.0
    %377 = vmatpush2.msra.mxu0 0.0
    %378 = vmatprep.subr.mxu0 0.0
    %379 = vmatpush2.msra.mxu0 0.0
    %380 = vmatprep.subr.mxu0 0.0
    %381 = vmatpush2.msra.mxu0 0.0
    %382 = vmatprep.subr.mxu0 0.0
    %383 = vmatpush2.msra.mxu0 0.0
    %384 = vmatprep.subr.mxu0 0.0
    %385 = vmatpush2.msra.mxu0 0.0
    %386 = vmatprep.subr.mxu0 0.0
    %387 = vmatpush2.msra.mxu0 0.0
    %388 = vmatprep.subr.mxu0 0.0
    %389 = vmatpush2.msra.mxu0 0.0
    %390 = vmatprep.subr.mxu0 0.0
    %391 = vmatpush2.msra.mxu0 0.0
    %392 = vmatprep.subr.mxu0 0.0
    %393 = vmatpush2.msra.mxu0 0.0
    %394 = vmatprep.subr.mxu0 0.0
    %395 = vmatpush2.msra.mxu0 0.0
    %396 = vmatprep.subr.mxu0 0.0
    %397 = vmatpush2.msra.mxu0 0.0
    %398 = vmatprep.subr.mxu0 0.0
    %399 = vmatpush2.msra.mxu0 0.0
    %400 = vmatprep.subr.mxu0 0.0
    %401 = vmatpush2.msra.mxu0 0.0
    %402 = vmatprep.subr.mxu0 0.0
    %403 = vmatpush2.msra.mxu0 0.0
    %404 = vmatprep.mubr.f32.mxu0 0.0
    %405 = vmatmul.mubr.f32.gmra.mxu0 %v338
    %v406 = vpop.f32.mrf.mxu0
    %v407 = vadd.f32 0.0, %v406
    %v408 = vpop.f32.mrf.mxu0
    %409 = vdwg.mxu0
    %v411 = vrot.slane %v407, 4
    %v413 = vadd.f32 %v169, %v411
    %v414 = vtanh.pop %v413
    %vm415 = vcmask 521220
    %416 = vst.msk [vmem:[#allocation2] sm:$0x30] %vm415, %v414
    %v418 = vrot.slane %v414, 4
    %v419 = vsel %vm178, %v418, 0
    %421 = vmatprep.subr.mxu0 0.0
    %422 = vmatpush1.msra.mxu0 0.0
    %423 = vmatprep.subr.mxu0 0.0
    %424 = vmatpush1.msra.mxu0 0.0
    %425 = vmatprep.subr.mxu0 0.0
    %426 = vmatpush1.msra.mxu0 0.0
    %427 = vmatprep.subr.mxu0 0.0
    %428 = vmatpush1.msra.mxu0 0.0
    %429 = vmatprep.subr.mxu0 0.0
    %430 = vmatpush1.msra.mxu0 0.0
    %431 = vmatprep.subr.mxu0 0.0
    %432 = vmatpush1.msra.mxu0 0.0
    %433 = vmatprep.subr.mxu0 0.0
    %434 = vmatpush1.msra.mxu0 0.0
    %435 = vmatprep.subr.mxu0 0.0
    %436 = vmatpush1.msra.mxu0 0.0
    %437 = vmatprep.subr.mxu0 0.0
    %438 = vmatpush1.msra.mxu0 %v73
    %439 = vmatprep.subr.mxu0 0.0
    %440 = vmatpush1.msra.mxu0 %v72
    %441 = vmatprep.subr.mxu0 0.0
    %442 = vmatpush1.msra.mxu0 %v71
    %443 = vmatprep.subr.mxu0 0.0
    %444 = vmatpush1.msra.mxu0 %v70
    %445 = vmatprep.subr.mxu0 0.0
    %446 = vmatpush1.msra.mxu0 %v69
    %447 = vmatprep.subr.mxu0 0.0
    %448 = vmatpush1.msra.mxu0 %v68
    %449 = vmatprep.subr.mxu0 0.0
    %450 = vmatpush1.msra.mxu0 %v67
    %451 = vmatprep.subr.mxu0 0.0
    %452 = vmatpush1.msra.mxu0 %v66
    %453 = vmatprep.subr.mxu0 0.0
    %454 = vmatpush2.msra.mxu0 0.0
    %455 = vmatprep.subr.mxu0 0.0
    %456 = vmatpush2.msra.mxu0 0.0
    %457 = vmatprep.subr.mxu0 0.0
    %458 = vmatpush2.msra.mxu0 0.0
    %459 = vmatprep.subr.mxu0 0.0
    %460 = vmatpush2.msra.mxu0 0.0
    %461 = vmatprep.subr.mxu0 0.0
    %462 = vmatpush2.msra.mxu0 0.0
    %463 = vmatprep.subr.mxu0 0.0
    %464 = vmatpush2.msra.mxu0 0.0
    %465 = vmatprep.subr.mxu0 0.0
    %466 = vmatpush2.msra.mxu0 0.0
    %467 = vmatprep.subr.mxu0 0.0
    %468 = vmatpush2.msra.mxu0 0.0
    %469 = vmatprep.subr.mxu0 0.0
    %470 = vmatpush2.msra.mxu0 0.0
    %471 = vmatprep.subr.mxu0 0.0
    %472 = vmatpush2.msra.mxu0 0.0
    %473 = vmatprep.subr.mxu0 0.0
    %474 = vmatpush2.msra.mxu0 0.0
    %475 = vmatprep.subr.mxu0 0.0
    %476 = vmatpush2.msra.mxu0 0.0
    %477 = vmatprep.subr.mxu0 0.0
    %478 = vmatpush2.msra.mxu0 0.0
    %479 = vmatprep.subr.mxu0 0.0
    %480 = vmatpush2.msra.mxu0 0.0
    %481 = vmatprep.subr.mxu0 0.0
    %482 = vmatpush2.msra.mxu0 0.0
    %483 = vmatprep.subr.mxu0 0.0
    %484 = vmatpush2.msra.mxu0 0.0
    %485 = vmatprep.mubr.f32.mxu0 0.0
    %486 = vmatmul.mubr.f32.gmra.mxu0 %v419
    %v487 = vpop.f32.mrf.mxu0
    %v488 = vadd.f32 0.0, %v487
    %v489 = vpop.f32.mrf.mxu0
    %490 = vdwg.mxu0
    %v492 = vrot.slane %v488, 2
    %v494 = vadd.f32 %v169, %v492
    %v495 = vtanh.pop %v494
    %vm496 = vcmask 523270
    %497 = vst.msk [vmem:[#allocation2] sm:$0xc0] %vm496, %v495
    %v499 = vrot.slane %v495, 6
    %v500 = vsel %vm178, %v499, 0
    %502 = vmatprep.subr.mxu0 0.0
    %503 = vmatpush1.msra.mxu0 0.0
    %504 = vmatprep.subr.mxu0 0.0
    %505 = vmatpush1.msra.mxu0 0.0
    %506 = vmatprep.subr.mxu0 0.0
    %507 = vmatpush1.msra.mxu0 0.0
    %508 = vmatprep.subr.mxu0 0.0
    %509 = vmatpush1.msra.mxu0 0.0
    %510 = vmatprep.subr.mxu0 0.0
    %511 = vmatpush1.msra.mxu0 0.0
    %512 = vmatprep.subr.mxu0 0.0
    %513 = vmatpush1.msra.mxu0 0.0
    %514 = vmatprep.subr.mxu0 0.0
    %515 = vmatpush1.msra.mxu0 0.0
    %516 = vmatprep.subr.mxu0 0.0
    %517 = vmatpush1.msra.mxu0 0.0
    %518 = vmatprep.subr.mxu0 0.0
    %519 = vmatpush1.msra.mxu0 %v73
    %520 = vmatprep.subr.mxu0 0.0
    %521 = vmatpush1.msra.mxu0 %v72
    %522 = vmatprep.subr.mxu0 0.0
    %523 = vmatpush1.msra.mxu0 %v71
    %524 = vmatprep.subr.mxu0 0.0
    %525 = vmatpush1.msra.mxu0 %v70
    %526 = vmatprep.subr.mxu0 0.0
    %527 = vmatpush1.msra.mxu0 %v69
    %528 = vmatprep.subr.mxu0 0.0
    %529 = vmatpush1.msra.mxu0 %v68
    %530 = vmatprep.subr.mxu0 0.0
    %531 = vmatpush1.msra.mxu0 %v67
    %532 = vmatprep.subr.mxu0 0.0
    %533 = vmatpush1.msra.mxu0 %v66
    %534 = vmatprep.subr.mxu0 0.0
    %535 = vmatpush2.msra.mxu0 0.0
    %536 = vmatprep.subr.mxu0 0.0
    %537 = vmatpush2.msra.mxu0 0.0
    %538 = vmatprep.subr.mxu0 0.0
    %539 = vmatpush2.msra.mxu0 0.0
    %540 = vmatprep.subr.mxu0 0.0
    %541 = vmatpush2.msra.mxu0 0.0
    %542 = vmatprep.subr.mxu0 0.0
    %543 = vmatpush2.msra.mxu0 0.0
    %544 = vmatprep.subr.mxu0 0.0
    %545 = vmatpush2.msra.mxu0 0.0
    %546 = vmatprep.subr.mxu0 0.0
    %547 = vmatpush2.msra.mxu0 0.0
    %548 = vmatprep.subr.mxu0 0.0
    %549 = vmatpush2.msra.mxu0 0.0
    %550 = vmatprep.subr.mxu0 0.0
    %551 = vmatpush2.msra.mxu0 0.0
    %552 = vmatprep.subr.mxu0 0.0
    %553 = vmatpush2.msra.mxu0 0.0
    %554 = vmatprep.subr.mxu0 0.0
    %555 = vmatpush2.msra.mxu0 0.0
    %556 = vmatprep.subr.mxu0 0.0
    %557 = vmatpush2.msra.mxu0 0.0
    %558 = vmatprep.subr.mxu0 0.0
    %559 = vmatpush2.msra.mxu0 0.0
    %560 = vmatprep.subr.mxu0 0.0
    %561 = vmatpush2.msra.mxu0 0.0
    %562 = vmatprep.subr.mxu0 0.0
    %563 = vmatpush2.msra.mxu0 0.0
    %564 = vmatprep.subr.mxu0 0.0
    %565 = vmatpush2.msra.mxu0 0.0
    %566 = vmatprep.mubr.f32.mxu0 0.0
    %567 = vmatmul.mubr.f32.gmra.mxu0 %v500
    %v568 = vpop.f32.mrf.mxu0
    %v569 = vadd.f32 0.0, %v568
    %v570 = vpop.f32.mrf.mxu0
    %571 = vdwg.mxu0
    %v572 = vadd.f32 %v174, %v569
    %v573 = vtanh.pop %v572
    %574 = vst.msk [vmem:[#allocation2 + $0x8] sm:$0x3] %vm254, %v573
    %v576 = vsel %vm178, %v573, 0
    %578 = vmatprep.subr.mxu0 0.0
    %579 = vmatpush1.msra.mxu0 0.0
    %580 = vmatprep.subr.mxu0 0.0
    %581 = vmatpush1.msra.mxu0 0.0
    %582 = vmatprep.subr.mxu0 0.0
    %583 = vmatpush1.msra.mxu0 0.0
    %584 = vmatprep.subr.mxu0 0.0
    %585 = vmatpush1.msra.mxu0 0.0
    %586 = vmatprep.subr.mxu0 0.0
    %587 = vmatpush1.msra.mxu0 0.0
    %588 = vmatprep.subr.mxu0 0.0
    %589 = vmatpush1.msra.mxu0 0.0
    %590 = vmatprep.subr.mxu0 0.0
    %591 = vmatpush1.msra.mxu0 0.0
    %592 = vmatprep.subr.mxu0 0.0
    %593 = vmatpush1.msra.mxu0 0.0
    %594 = vmatprep.subr.mxu0 0.0
    %595 = vmatpush1.msra.mxu0 %v73
    %596 = vmatprep.subr.mxu0 0.0
    %597 = vmatpush1.msra.mxu0 %v72
    %598 = vmatprep.subr.mxu0 0.0
    %599 = vmatpush1.msra.mxu0 %v71
    %600 = vmatprep.subr.mxu0 0.0
    %601 = vmatpush1.msra.mxu0 %v70
    %602 = vmatprep.subr.mxu0 0.0
    %603 = vmatpush1.msra.mxu0 %v69
    %604 = vmatprep.subr.mxu0 0.0
    %605 = vmatpush1.msra.mxu0 %v68
    %606 = vmatprep.subr.mxu0 0.0
    %607 = vmatpush1.msra.mxu0 %v67
    %608 = vmatprep.subr.mxu0 0.0
    %609 = vmatpush1.msra.mxu0 %v66
    %610 = vmatprep.subr.mxu0 0.0
    %611 = vmatpush2.msra.mxu0 0.0
    %612 = vmatprep.subr.mxu0 0.0
    %613 = vmatpush2.msra.mxu0 0.0
    %614 = vmatprep.subr.mxu0 0.0
    %615 = vmatpush2.msra.mxu0 0.0
    %616 = vmatprep.subr.mxu0 0.0
    %617 = vmatpush2.msra.mxu0 0.0
    %618 = vmatprep.subr.mxu0 0.0
    %619 = vmatpush2.msra.mxu0 0.0
    %620 = vmatprep.subr.mxu0 0.0
    %621 = vmatpush2.msra.mxu0 0.0
    %622 = vmatprep.subr.mxu0 0.0
    %623 = vmatpush2.msra.mxu0 0.0
    %624 = vmatprep.subr.mxu0 0.0
    %625 = vmatpush2.msra.mxu0 0.0
    %626 = vmatprep.subr.mxu0 0.0
    %627 = vmatpush2.msra.mxu0 0.0
    %628 = vmatprep.subr.mxu0 0.0
    %629 = vmatpush2.msra.mxu0 0.0
    %630 = vmatprep.subr.mxu0 0.0
    %631 = vmatpush2.msra.mxu0 0.0
    %632 = vmatprep.subr.mxu0 0.0
    %633 = vmatpush2.msra.mxu0 0.0
    %634 = vmatprep.subr.mxu0 0.0
    %635 = vmatpush2.msra.mxu0 0.0
    %636 = vmatprep.subr.mxu0 0.0
    %637 = vmatpush2.msra.mxu0 0.0
    %638 = vmatprep.subr.mxu0 0.0
    %639 = vmatpush2.msra.mxu0 0.0
    %640 = vmatprep.subr.mxu0 0.0
    %641 = vmatpush2.msra.mxu0 0.0
    %642 = vmatprep.mubr.f32.mxu0 0.0
    %643 = vmatmul.mubr.f32.gmra.mxu0 %v576
    %v644 = vpop.f32.mrf.mxu0
    %v645 = vadd.f32 0.0, %v644
    %v646 = vpop.f32.mrf.mxu0
    %647 = vdwg.mxu0
    %v649 = vrot.slane %v645, 6
    %v651 = vadd.f32 %v174, %v649
    %v652 = vtanh.pop %v651
    %653 = vst.msk [vmem:[#allocation2 + $0x8] sm:$0xc] %vm334, %v652
    %v655 = vrot.slane %v652, 2
    %v656 = vsel %vm178, %v655, 0
    %658 = vmatprep.subr.mxu0 0.0
    %659 = vmatpush1.msra.mxu0 0.0
    %660 = vmatprep.subr.mxu0 0.0
    %661 = vmatpush1.msra.mxu0 0.0
    %662 = vmatprep.subr.mxu0 0.0
    %663 = vmatpush1.msra.mxu0 0.0
    %664 = vmatprep.subr.mxu0 0.0
    %665 = vmatpush1.msra.mxu0 0.0
    %666 = vmatprep.subr.mxu0 0.0
    %667 = vmatpush1.msra.mxu0 0.0
    %668 = vmatprep.subr.mxu0 0.0
    %669 = vmatpush1.msra.mxu0 0.0
    %670 = vmatprep.subr.mxu0 0.0
    %671 = vmatpush1.msra.mxu0 0.0
    %672 = vmatprep.subr.mxu0 0.0
    %673 = vmatpush1.msra.mxu0 0.0
    %674 = vmatprep.subr.mxu0 0.0
    %675 = vmatpush1.msra.mxu0 %v73
    %676 = vmatprep.subr.mxu0 0.0
    %677 = vmatpush1.msra.mxu0 %v72
    %678 = vmatprep.subr.mxu0 0.0
    %679 = vmatpush1.msra.mxu0 %v71
    %680 = vmatprep.subr.mxu0 0.0
    %681 = vmatpush1.msra.mxu0 %v70
    %682 = vmatprep.subr.mxu0 0.0
    %683 = vmatpush1.msra.mxu0 %v69
    %684 = vmatprep.subr.mxu0 0.0
    %685 = vmatpush1.msra.mxu0 %v68
    %686 = vmatprep.subr.mxu0 0.0
    %687 = vmatpush1.msra.mxu0 %v67
    %688 = vmatprep.subr.mxu0 0.0
    %689 = vmatpush1.msra.mxu0 %v66
    %690 = vmatprep.subr.mxu0 0.0
    %691 = vmatpush2.msra.mxu0 0.0
    %692 = vmatprep.subr.mxu0 0.0
    %693 = vmatpush2.msra.mxu0 0.0
    %694 = vmatprep.subr.mxu0 0.0
    %695 = vmatpush2.msra.mxu0 0.0
    %696 = vmatprep.subr.mxu0 0.0
    %697 = vmatpush2.msra.mxu0 0.0
    %698 = vmatprep.subr.mxu0 0.0
    %699 = vmatpush2.msra.mxu0 0.0
    %700 = vmatprep.subr.mxu0 0.0
    %701 = vmatpush2.msra.mxu0 0.0
    %702 = vmatprep.subr.mxu0 0.0
    %703 = vmatpush2.msra.mxu0 0.0
    %704 = vmatprep.subr.mxu0 0.0
    %705 = vmatpush2.msra.mxu0 0.0
    %706 = vmatprep.subr.mxu0 0.0
    %707 = vmatpush2.msra.mxu0 0.0
    %708 = vmatprep.subr.mxu0 0.0
    %709 = vmatpush2.msra.mxu0 0.0
    %710 = vmatprep.subr.mxu0 0.0
    %711 = vmatpush2.msra.mxu0 0.0
    %712 = vmatprep.subr.mxu0 0.0
    %713 = vmatpush2.msra.mxu0 0.0
    %714 = vmatprep.subr.mxu0 0.0
    %715 = vmatpush2.msra.mxu0 0.0
    %716 = vmatprep.subr.mxu0 0.0
    %717 = vmatpush2.msra.mxu0 0.0
    %718 = vmatprep.subr.mxu0 0.0
    %719 = vmatpush2.msra.mxu0 0.0
    %720 = vmatprep.subr.mxu0 0.0
    %721 = vmatpush2.msra.mxu0 0.0
    %722 = vmatprep.mubr.f32.mxu0 0.0
    %723 = vmatmul.mubr.f32.gmra.mxu0 %v656
    %v724 = vpop.f32.mrf.mxu0
    %v725 = vadd.f32 0.0, %v724
    %v726 = vpop.f32.mrf.mxu0
    %727 = vdwg.mxu0
    %v729 = vrot.slane %v725, 4
    %v731 = vadd.f32 %v174, %v729
    %v732 = vtanh.pop %v731
    %733 = vst.msk [vmem:[#allocation2 + $0x8] sm:$0x30] %vm415, %v732
    %v735 = vrot.slane %v732, 4
    %v736 = vsel %vm178, %v735, 0
    %738 = vmatprep.subr.mxu0 0.0
    %739 = vmatpush1.msra.mxu0 0.0
    %740 = vmatprep.subr.mxu0 0.0
    %741 = vmatpush1.msra.mxu0 0.0
    %742 = vmatprep.subr.mxu0 0.0
    %743 = vmatpush1.msra.mxu0 0.0
    %744 = vmatprep.subr.mxu0 0.0
    %745 = vmatpush1.msra.mxu0 0.0
    %746 = vmatprep.subr.mxu0 0.0
    %747 = vmatpush1.msra.mxu0 0.0
    %748 = vmatprep.subr.mxu0 0.0
    %749 = vmatpush1.msra.mxu0 0.0
    %750 = vmatprep.subr.mxu0 0.0
    %751 = vmatpush1.msra.mxu0 0.0
    %752 = vmatprep.subr.mxu0 0.0
    %753 = vmatpush1.msra.mxu0 0.0
    %754 = vmatprep.subr.mxu0 0.0
    %755 = vmatpush1.msra.mxu0 %v73
    %756 = vmatprep.subr.mxu0 0.0
    %757 = vmatpush1.msra.mxu0 %v72
    %758 = vmatprep.subr.mxu0 0.0
    %759 = vmatpush1.msra.mxu0 %v71
    %760 = vmatprep.subr.mxu0 0.0
    %761 = vmatpush1.msra.mxu0 %v70
    %762 = vmatprep.subr.mxu0 0.0
    %763 = vmatpush1.msra.mxu0 %v69
    %764 = vmatprep.subr.mxu0 0.0
    %765 = vmatpush1.msra.mxu0 %v68
    %766 = vmatprep.subr.mxu0 0.0
    %767 = vmatpush1.msra.mxu0 %v67
    %768 = vmatprep.subr.mxu0 0.0
    %769 = vmatpush1.msra.mxu0 %v66
    %770 = vmatprep.subr.mxu0 0.0
    %771 = vmatpush2.msra.mxu0 0.0
    %772 = vmatprep.subr.mxu0 0.0
    %773 = vmatpush2.msra.mxu0 0.0
    %774 = vmatprep.subr.mxu0 0.0
    %775 = vmatpush2.msra.mxu0 0.0
    %776 = vmatprep.subr.mxu0 0.0
    %777 = vmatpush2.msra.mxu0 0.0
    %778 = vmatprep.subr.mxu0 0.0
    %779 = vmatpush2.msra.mxu0 0.0
    %780 = vmatprep.subr.mxu0 0.0
    %781 = vmatpush2.msra.mxu0 0.0
    %782 = vmatprep.subr.mxu0 0.0
    %783 = vmatpush2.msra.mxu0 0.0
    %784 = vmatprep.subr.mxu0 0.0
    %785 = vmatpush2.msra.mxu0 0.0
    %786 = vmatprep.subr.mxu0 0.0
    %787 = vmatpush2.msra.mxu0 0.0
    %788 = vmatprep.subr.mxu0 0.0
    %789 = vmatpush2.msra.mxu0 0.0
    %790 = vmatprep.subr.mxu0 0.0
    %791 = vmatpush2.msra.mxu0 0.0
    %792 = vmatprep.subr.mxu0 0.0
    %793 = vmatpush2.msra.mxu0 0.0
    %794 = vmatprep.subr.mxu0 0.0
    %795 = vmatpush2.msra.mxu0 0.0
    %796 = vmatprep.subr.mxu0 0.0
    %797 = vmatpush2.msra.mxu0 0.0
    %798 = vmatprep.subr.mxu0 0.0
    %799 = vmatpush2.msra.mxu0 0.0
    %800 = vmatprep.subr.mxu0 0.0
    %801 = vmatpush2.msra.mxu0 0.0
    %802 = vmatprep.mubr.f32.mxu0 0.0
    %803 = vmatmul.mubr.f32.gmra.mxu0 %v736
    %v804 = vpop.f32.mrf.mxu0
    %v805 = vadd.f32 0.0, %v804
    %v806 = vpop.f32.mrf.mxu0
    %807 = vdwg.mxu0
    %v809 = vrot.slane %v805, 2
    %v811 = vadd.f32 %v174, %v809
    %v812 = vtanh.pop %v811
    %813 = vst.msk [vmem:[#allocation2 + $0x8] sm:$0xc0] %vm496, %v812
    %v814 = vld [vmem:[#allocation2] sm:$0xff]
    %v815 = vld [vmem:[#allocation2 + $0x8] sm:$0xff]
    %v816 = vld [vmem:[%s4] sm:$0xff]
    %v817 = vld [vmem:[%s4 + $0x8] sm:$0xff]
    %v818 = vld [vmem:[%s4 + $0x10] sm:$0xff]
    %v819 = vld [vmem:[%s4 + $0x18] sm:$0xff]
    %v820 = vld [vmem:[%s4 + $0x20] sm:$0xff]
    %v821 = vld [vmem:[%s4 + $0x28] sm:$0xff]
    %v822 = vld [vmem:[%s4 + $0x30] sm:$0xff]
    %v823 = vld [vmem:[%s4 + $0x38] sm:$0xff]
    %v824 = vld [vmem:[%s7] sm:$0x1]
    %v826 = vlaneseq
    %v827 = vshrl.u32 %v826, 7
    %v828 = vsub.s32 0, %v827
    %v829 = vrot.slane %v824, %v828
    %v832 = vsel %vm178, %v814, 0
    %v835 = vsel %vm178, %v815, 0
    %837 = vmatprep.subr.mxu0 0.0
    %838 = vmatpush1.msra.mxu0 0.0
    %839 = vmatprep.subr.mxu0 0.0
    %840 = vmatpush1.msra.mxu0 0.0
    %841 = vmatprep.subr.mxu0 0.0
    %842 = vmatpush1.msra.mxu0 0.0
    %843 = vmatprep.subr.mxu0 0.0
    %844 = vmatpush1.msra.mxu0 0.0
    %845 = vmatprep.subr.mxu0 0.0
    %846 = vmatpush1.msra.mxu0 0.0
    %847 = vmatprep.subr.mxu0 0.0
    %848 = vmatpush1.msra.mxu0 0.0
    %849 = vmatprep.subr.mxu0 0.0
    %850 = vmatpush1.msra.mxu0 0.0
    %851 = vmatprep.subr.mxu0 0.0
    %852 = vmatpush1.msra.mxu0 0.0
    %853 = vmatprep.subr.mxu0 0.0
    %854 = vmatpush1.msra.mxu0 %v823
    %855 = vmatprep.subr.mxu0 0.0
    %856 = vmatpush1.msra.mxu0 %v822
    %857 = vmatprep.subr.mxu0 0.0
    %858 = vmatpush1.msra.mxu0 %v821
    %859 = vmatprep.subr.mxu0 0.0
    %860 = vmatpush1.msra.mxu0 %v820
    %861 = vmatprep.subr.mxu0 0.0
    %862 = vmatpush1.msra.mxu0 %v819
    %863 = vmatprep.subr.mxu0 0.0
    %864 = vmatpush1.msra.mxu0 %v818
    %865 = vmatprep.subr.mxu0 0.0
    %866 = vmatpush1.msra.mxu0 %v817
    %867 = vmatprep.subr.mxu0 0.0
    %868 = vmatpush1.msra.mxu0 %v816
    %869 = vmatprep.subr.mxu0 0.0
    %870 = vmatpush2.msra.mxu0 0.0
    %871 = vmatprep.subr.mxu0 0.0
    %872 = vmatpush2.msra.mxu0 0.0
    %873 = vmatprep.subr.mxu0 0.0
    %874 = vmatpush2.msra.mxu0 0.0
    %875 = vmatprep.subr.mxu0 0.0
    %876 = vmatpush2.msra.mxu0 0.0
    %877 = vmatprep.subr.mxu0 0.0
    %878 = vmatpush2.msra.mxu0 0.0
    %879 = vmatprep.subr.mxu0 0.0
    %880 = vmatpush2.msra.mxu0 0.0
    %881 = vmatprep.subr.mxu0 0.0
    %882 = vmatpush2.msra.mxu0 0.0
    %883 = vmatprep.subr.mxu0 0.0
    %884 = vmatpush2.msra.mxu0 0.0
    %885 = vmatprep.subr.mxu0 0.0
    %886 = vmatpush2.msra.mxu0 0.0
    %887 = vmatprep.subr.mxu0 0.0
    %888 = vmatpush2.msra.mxu0 0.0
    %889 = vmatprep.subr.mxu0 0.0
    %890 = vmatpush2.msra.mxu0 0.0
    %891 = vmatprep.subr.mxu0 0.0
    %892 = vmatpush2.msra.mxu0 0.0
    %893 = vmatprep.subr.mxu0 0.0
    %894 = vmatpush2.msra.mxu0 0.0
    %895 = vmatprep.subr.mxu0 0.0
    %896 = vmatpush2.msra.mxu0 0.0
    %897 = vmatprep.subr.mxu0 0.0
    %898 = vmatpush2.msra.mxu0 0.0
    %899 = vmatprep.subr.mxu0 0.0
    %900 = vmatpush2.msra.mxu0 0.0
    %901 = vmatprep.mubr.f32.mxu0 0.0
    %902 = vmatmul.mubr.f32.gmra.mxu0 %v832
    %v903 = vpop.f32.mrf.mxu0
    %v904 = vadd.f32 %v829, %v903
    %v905 = vpop.f32.mrf.mxu0
    %906 = vmatprep.mubr.f32.mxu0 0.0
    %907 = vmatmul.mubr.f32.gmra.mxu0 %v835
    %v908 = vpop.f32.mrf.mxu0
    %v909 = vadd.f32 %v829, %v908
    %v910 = vpop.f32.mrf.mxu0
    %911 = vdwg.mxu0
    %s912 = scalar_lea.vmem %s1, 2
    %v913 = vld [vmem:[%s912] sm:$0x3]
    %v915 = vsel %vm178, %v913, 0
    %917 = vmatprep.subr.mxu0 0.0
    %918 = vmatpush1.msra.mxu0 0.0
    %919 = vmatprep.subr.mxu0 0.0
    %920 = vmatpush1.msra.mxu0 0.0
    %921 = vmatprep.subr.mxu0 0.0
    %922 = vmatpush1.msra.mxu0 0.0
    %923 = vmatprep.subr.mxu0 0.0
    %924 = vmatpush1.msra.mxu0 0.0
    %925 = vmatprep.subr.mxu0 0.0
    %926 = vmatpush1.msra.mxu0 0.0
    %927 = vmatprep.subr.mxu0 0.0
    %928 = vmatpush1.msra.mxu0 0.0
    %929 = vmatprep.subr.mxu0 0.0
    %930 = vmatpush1.msra.mxu0 0.0
    %931 = vmatprep.subr.mxu0 0.0
    %932 = vmatpush1.msra.mxu0 0.0
    %933 = vmatprep.subr.mxu0 0.0
    %934 = vmatpush1.msra.mxu0 %v81
    %935 = vmatprep.subr.mxu0 0.0
    %936 = vmatpush1.msra.mxu0 %v80
    %937 = vmatprep.subr.mxu0 0.0
    %938 = vmatpush1.msra.mxu0 %v79
    %939 = vmatprep.subr.mxu0 0.0
    %940 = vmatpush1.msra.mxu0 %v78
    %941 = vmatprep.subr.mxu0 0.0
    %942 = vmatpush1.msra.mxu0 %v77
    %943 = vmatprep.subr.mxu0 0.0
    %944 = vmatpush1.msra.mxu0 %v76
    %945 = vmatprep.subr.mxu0 0.0
    %946 = vmatpush1.msra.mxu0 %v75
    %947 = vmatprep.subr.mxu0 0.0
    %948 = vmatpush1.msra.mxu0 %v74
    %949 = vmatprep.subr.mxu0 0.0
    %950 = vmatpush2.msra.mxu0 0.0
    %951 = vmatprep.subr.mxu0 0.0
    %952 = vmatpush2.msra.mxu0 0.0
    %953 = vmatprep.subr.mxu0 0.0
    %954 = vmatpush2.msra.mxu0 0.0
    %955 = vmatprep.subr.mxu0 0.0
    %956 = vmatpush2.msra.mxu0 0.0
    %957 = vmatprep.subr.mxu0 0.0
    %958 = vmatpush2.msra.mxu0 0.0
    %959 = vmatprep.subr.mxu0 0.0
    %960 = vmatpush2.msra.mxu0 0.0
    %961 = vmatprep.subr.mxu0 0.0
    %962 = vmatpush2.msra.mxu0 0.0
    %963 = vmatprep.subr.mxu0 0.0
    %964 = vmatpush2.msra.mxu0 0.0
    %965 = vmatprep.subr.mxu0 0.0
    %966 = vmatpush2.msra.mxu0 0.0
    %967 = vmatprep.subr.mxu0 0.0
    %968 = vmatpush2.msra.mxu0 0.0
    %969 = vmatprep.subr.mxu0 0.0
    %970 = vmatpush2.msra.mxu0 0.0
    %971 = vmatprep.subr.mxu0 0.0
    %972 = vmatpush2.msra.mxu0 0.0
    %973 = vmatprep.subr.mxu0 0.0
    %974 = vmatpush2.msra.mxu0 0.0
    %975 = vmatprep.subr.mxu0 0.0
    %976 = vmatpush2.msra.mxu0 0.0
    %977 = vmatprep.subr.mxu0 0.0
    %978 = vmatpush2.msra.mxu0 0.0
    %979 = vmatprep.subr.mxu0 0.0
    %980 = vmatpush2.msra.mxu0 0.0
    %981 = vmatprep.mubr.f32.mxu0 0.0
    %982 = vmatmul.mubr.f32.gmra.mxu0 %v915
    %v983 = vpop.f32.mrf.mxu0
    %v984 = vadd.f32 0.0, %v983
    %v985 = vpop.f32.mrf.mxu0
    %986 = vdwg.mxu0
    %v987 = vadd.f32 %v904, %v984
    %v988 = vtanh.pop %v987
    %989 = vst.msk [vmem:[#allocation3] sm:$0x3] %vm254, %v988
    %v991 = vsel %vm178, %v988, 0
    %993 = vmatprep.subr.mxu0 0.0
    %994 = vmatpush1.msra.mxu0 0.0
    %995 = vmatprep.subr.mxu0 0.0
    %996 = vmatpush1.msra.mxu0 0.0
    %997 = vmatprep.subr.mxu0 0.0
    %998 = vmatpush1.msra.mxu0 0.0
    %999 = vmatprep.subr.mxu0 0.0
    %1000 = vmatpush1.msra.mxu0 0.0
    %1001 = vmatprep.subr.mxu0 0.0
    %1002 = vmatpush1.msra.mxu0 0.0
    %1003 = vmatprep.subr.mxu0 0.0
    %1004 = vmatpush1.msra.mxu0 0.0
    %1005 = vmatprep.subr.mxu0 0.0
    %1006 = vmatpush1.msra.mxu0 0.0
    %1007 = vmatprep.subr.mxu0 0.0
    %1008 = vmatpush1.msra.mxu0 0.0
    %1009 = vmatprep.subr.mxu0 0.0
    %1010 = vmatpush1.msra.mxu0 %v81
    %1011 = vmatprep.subr.mxu0 0.0
    %1012 = vmatpush1.msra.mxu0 %v80
    %1013 = vmatprep.subr.mxu0 0.0
    %1014 = vmatpush1.msra.mxu0 %v79
    %1015 = vmatprep.subr.mxu0 0.0
    %1016 = vmatpush1.msra.mxu0 %v78
    %1017 = vmatprep.subr.mxu0 0.0
    %1018 = vmatpush1.msra.mxu0 %v77
    %1019 = vmatprep.subr.mxu0 0.0
    %1020 = vmatpush1.msra.mxu0 %v76
    %1021 = vmatprep.subr.mxu0 0.0
    %1022 = vmatpush1.msra.mxu0 %v75
    %1023 = vmatprep.subr.mxu0 0.0
    %1024 = vmatpush1.msra.mxu0 %v74
    %1025 = vmatprep.subr.mxu0 0.0
    %1026 = vmatpush2.msra.mxu0 0.0
    %1027 = vmatprep.subr.mxu0 0.0
    %1028 = vmatpush2.msra.mxu0 0.0
    %1029 = vmatprep.subr.mxu0 0.0
    %1030 = vmatpush2.msra.mxu0 0.0
    %1031 = vmatprep.subr.mxu0 0.0
    %1032 = vmatpush2.msra.mxu0 0.0
    %1033 = vmatprep.subr.mxu0 0.0
    %1034 = vmatpush2.msra.mxu0 0.0
    %1035 = vmatprep.subr.mxu0 0.0
    %1036 = vmatpush2.msra.mxu0 0.0
    %1037 = vmatprep.subr.mxu0 0.0
    %1038 = vmatpush2.msra.mxu0 0.0
    %1039 = vmatprep.subr.mxu0 0.0
    %1040 = vmatpush2.msra.mxu0 0.0
    %1041 = vmatprep.subr.mxu0 0.0
    %1042 = vmatpush2.msra.mxu0 0.0
    %1043 = vmatprep.subr.mxu0 0.0
    %1044 = vmatpush2.msra.mxu0 0.0
    %1045 = vmatprep.subr.mxu0 0.0
    %1046 = vmatpush2.msra.mxu0 0.0
    %1047 = vmatprep.subr.mxu0 0.0
    %1048 = vmatpush2.msra.mxu0 0.0
    %1049 = vmatprep.subr.mxu0 0.0
    %1050 = vmatpush2.msra.mxu0 0.0
    %1051 = vmatprep.subr.mxu0 0.0
    %1052 = vmatpush2.msra.mxu0 0.0
    %1053 = vmatprep.subr.mxu0 0.0
    %1054 = vmatpush2.msra.mxu0 0.0
    %1055 = vmatprep.subr.mxu0 0.0
    %1056 = vmatpush2.msra.mxu0 0.0
    %1057 = vmatprep.mubr.f32.mxu0 0.0
    %1058 = vmatmul.mubr.f32.gmra.mxu0 %v991
    %v1059 = vpop.f32.mrf.mxu0
    %v1060 = vadd.f32 0.0, %v1059
    %v1061 = vpop.f32.mrf.mxu0
    %1062 = vdwg.mxu0
    %v1064 = vrot.slane %v1060, 6
    %v1066 = vadd.f32 %v904, %v1064
    %v1067 = vtanh.pop %v1066
    %1068 = vst.msk [vmem:[#allocation3] sm:$0xc] %vm334, %v1067
    %v1070 = vrot.slane %v1067, 2
    %v1071 = vsel %vm178, %v1070, 0
    %1073 = vmatprep.subr.mxu0 0.0
    %1074 = vmatpush1.msra.mxu0 0.0
    %1075 = vmatprep.subr.mxu0 0.0
    %1076 = vmatpush1.msra.mxu0 0.0
    %1077 = vmatprep.subr.mxu0 0.0
    %1078 = vmatpush1.msra.mxu0 0.0
    %1079 = vmatprep.subr.mxu0 0.0
    %1080 = vmatpush1.msra.mxu0 0.0
    %1081 = vmatprep.subr.mxu0 0.0
    %1082 = vmatpush1.msra.mxu0 0.0
    %1083 = vmatprep.subr.mxu0 0.0
    %1084 = vmatpush1.msra.mxu0 0.0
    %1085 = vmatprep.subr.mxu0 0.0
    %1086 = vmatpush1.msra.mxu0 0.0
    %1087 = vmatprep.subr.mxu0 0.0
    %1088 = vmatpush1.msra.mxu0 0.0
    %1089 = vmatprep.subr.mxu0 0.0
    %1090 = vmatpush1.msra.mxu0 %v81
    %1091 = vmatprep.subr.mxu0 0.0
    %1092 = vmatpush1.msra.mxu0 %v80
    %1093 = vmatprep.subr.mxu0 0.0
    %1094 = vmatpush1.msra.mxu0 %v79
    %1095 = vmatprep.subr.mxu0 0.0
    %1096 = vmatpush1.msra.mxu0 %v78
    %1097 = vmatprep.subr.mxu0 0.0
    %1098 = vmatpush1.msra.mxu0 %v77
    %1099 = vmatprep.subr.mxu0 0.0
    %1100 = vmatpush1.msra.mxu0 %v76
    %1101 = vmatprep.subr.mxu0 0.0
    %1102 = vmatpush1.msra.mxu0 %v75
    %1103 = vmatprep.subr.mxu0 0.0
    %1104 = vmatpush1.msra.mxu0 %v74
    %1105 = vmatprep.subr.mxu0 0.0
    %1106 = vmatpush2.msra.mxu0 0.0
    %1107 = vmatprep.subr.mxu0 0.0
    %1108 = vmatpush2.msra.mxu0 0.0
    %1109 = vmatprep.subr.mxu0 0.0
    %1110 = vmatpush2.msra.mxu0 0.0
    %1111 = vmatprep.subr.mxu0 0.0
    %1112 = vmatpush2.msra.mxu0 0.0
    %1113 = vmatprep.subr.mxu0 0.0
    %1114 = vmatpush2.msra.mxu0 0.0
    %1115 = vmatprep.subr.mxu0 0.0
    %1116 = vmatpush2.msra.mxu0 0.0
    %1117 = vmatprep.subr.mxu0 0.0
    %1118 = vmatpush2.msra.mxu0 0.0
    %1119 = vmatprep.subr.mxu0 0.0
    %1120 = vmatpush2.msra.mxu0 0.0
    %1121 = vmatprep.subr.mxu0 0.0
    %1122 = vmatpush2.msra.mxu0 0.0
    %1123 = vmatprep.subr.mxu0 0.0
    %1124 = vmatpush2.msra.mxu0 0.0
    %1125 = vmatprep.subr.mxu0 0.0
    %1126 = vmatpush2.msra.mxu0 0.0
    %1127 = vmatprep.subr.mxu0 0.0
    %1128 = vmatpush2.msra.mxu0 0.0
    %1129 = vmatprep.subr.mxu0 0.0
    %1130 = vmatpush2.msra.mxu0 0.0
    %1131 = vmatprep.subr.mxu0 0.0
    %1132 = vmatpush2.msra.mxu0 0.0
    %1133 = vmatprep.subr.mxu0 0.0
    %1134 = vmatpush2.msra.mxu0 0.0
    %1135 = vmatprep.subr.mxu0 0.0
    %1136 = vmatpush2.msra.mxu0 0.0
    %1137 = vmatprep.mubr.f32.mxu0 0.0
    %1138 = vmatmul.mubr.f32.gmra.mxu0 %v1071
    %v1139 = vpop.f32.mrf.mxu0
    %v1140 = vadd.f32 0.0, %v1139
    %v1141 = vpop.f32.mrf.mxu0
    %1142 = vdwg.mxu0
    %v1144 = vrot.slane %v1140, 4
    %v1146 = vadd.f32 %v904, %v1144
    %v1147 = vtanh.pop %v1146
    %1148 = vst.msk [vmem:[#allocation3] sm:$0x30] %vm415, %v1147
    %v1150 = vrot.slane %v1147, 4
    %v1151 = vsel %vm178, %v1150, 0
    %1153 = vmatprep.subr.mxu0 0.0
    %1154 = vmatpush1.msra.mxu0 0.0
    %1155 = vmatprep.subr.mxu0 0.0
    %1156 = vmatpush1.msra.mxu0 0.0
    %1157 = vmatprep.subr.mxu0 0.0
    %1158 = vmatpush1.msra.mxu0 0.0
    %1159 = vmatprep.subr.mxu0 0.0
    %1160 = vmatpush1.msra.mxu0 0.0
    %1161 = vmatprep.subr.mxu0 0.0
    %1162 = vmatpush1.msra.mxu0 0.0
    %1163 = vmatprep.subr.mxu0 0.0
    %1164 = vmatpush1.msra.mxu0 0.0
    %1165 = vmatprep.subr.mxu0 0.0
    %1166 = vmatpush1.msra.mxu0 0.0
    %1167 = vmatprep.subr.mxu0 0.0
    %1168 = vmatpush1.msra.mxu0 0.0
    %1169 = vmatprep.subr.mxu0 0.0
    %1170 = vmatpush1.msra.mxu0 %v81
    %1171 = vmatprep.subr.mxu0 0.0
    %1172 = vmatpush1.msra.mxu0 %v80
    %1173 = vmatprep.subr.mxu0 0.0
    %1174 = vmatpush1.msra.mxu0 %v79
    %1175 = vmatprep.subr.mxu0 0.0
    %1176 = vmatpush1.msra.mxu0 %v78
    %1177 = vmatprep.subr.mxu0 0.0
    %1178 = vmatpush1.msra.mxu0 %v77
    %1179 = vmatprep.subr.mxu0 0.0
    %1180 = vmatpush1.msra.mxu0 %v76
    %1181 = vmatprep.subr.mxu0 0.0
    %1182 = vmatpush1.msra.mxu0 %v75
    %1183 = vmatprep.subr.mxu0 0.0
    %1184 = vmatpush1.msra.mxu0 %v74
    %1185 = vmatprep.subr.mxu0 0.0
    %1186 = vmatpush2.msra.mxu0 0.0
    %1187 = vmatprep.subr.mxu0 0.0
    %1188 = vmatpush2.msra.mxu0 0.0
    %1189 = vmatprep.subr.mxu0 0.0
    %1190 = vmatpush2.msra.mxu0 0.0
    %1191 = vmatprep.subr.mxu0 0.0
    %1192 = vmatpush2.msra.mxu0 0.0
    %1193 = vmatprep.subr.mxu0 0.0
    %1194 = vmatpush2.msra.mxu0 0.0
    %1195 = vmatprep.subr.mxu0 0.0
    %1196 = vmatpush2.msra.mxu0 0.0
    %1197 = vmatprep.subr.mxu0 0.0
    %1198 = vmatpush2.msra.mxu0 0.0
    %1199 = vmatprep.subr.mxu0 0.0
    %1200 = vmatpush2.msra.mxu0 0.0
    %1201 = vmatprep.subr.mxu0 0.0
    %1202 = vmatpush2.msra.mxu0 0.0
    %1203 = vmatprep.subr.mxu0 0.0
    %1204 = vmatpush2.msra.mxu0 0.0
    %1205 = vmatprep.subr.mxu0 0.0
    %1206 = vmatpush2.msra.mxu0 0.0
    %1207 = vmatprep.subr.mxu0 0.0
    %1208 = vmatpush2.msra.mxu0 0.0
    %1209 = vmatprep.subr.mxu0 0.0
    %1210 = vmatpush2.msra.mxu0 0.0
    %1211 = vmatprep.subr.mxu0 0.0
    %1212 = vmatpush2.msra.mxu0 0.0
    %1213 = vmatprep.subr.mxu0 0.0
    %1214 = vmatpush2.msra.mxu0 0.0
    %1215 = vmatprep.subr.mxu0 0.0
    %1216 = vmatpush2.msra.mxu0 0.0
    %1217 = vmatprep.mubr.f32.mxu0 0.0
    %1218 = vmatmul.mubr.f32.gmra.mxu0 %v1151
    %v1219 = vpop.f32.mrf.mxu0
    %v1220 = vadd.f32 0.0, %v1219
    %v1221 = vpop.f32.mrf.mxu0
    %1222 = vdwg.mxu0
    %v1224 = vrot.slane %v1220, 2
    %v1226 = vadd.f32 %v904, %v1224
    %v1227 = vtanh.pop %v1226
    %1228 = vst.msk [vmem:[#allocation3] sm:$0xc0] %vm496, %v1227
    %v1230 = vrot.slane %v1227, 6
    %v1231 = vsel %vm178, %v1230, 0
    %1233 = vmatprep.subr.mxu0 0.0
    %1234 = vmatpush1.msra.mxu0 0.0
    %1235 = vmatprep.subr.mxu0 0.0
    %1236 = vmatpush1.msra.mxu0 0.0
    %1237 = vmatprep.subr.mxu0 0.0
    %1238 = vmatpush1.msra.mxu0 0.0
    %1239 = vmatprep.subr.mxu0 0.0
    %1240 = vmatpush1.msra.mxu0 0.0
    %1241 = vmatprep.subr.mxu0 0.0
    %1242 = vmatpush1.msra.mxu0 0.0
    %1243 = vmatprep.subr.mxu0 0.0
    %1244 = vmatpush1.msra.mxu0 0.0
    %1245 = vmatprep.subr.mxu0 0.0
    %1246 = vmatpush1.msra.mxu0 0.0
    %1247 = vmatprep.subr.mxu0 0.0
    %1248 = vmatpush1.msra.mxu0 0.0
    %1249 = vmatprep.subr.mxu0 0.0
    %1250 = vmatpush1.msra.mxu0 %v81
    %1251 = vmatprep.subr.mxu0 0.0
    %1252 = vmatpush1.msra.mxu0 %v80
    %1253 = vmatprep.subr.mxu0 0.0
    %1254 = vmatpush1.msra.mxu0 %v79
    %1255 = vmatprep.subr.mxu0 0.0
    %1256 = vmatpush1.msra.mxu0 %v78
    %1257 = vmatprep.subr.mxu0 0.0
    %1258 = vmatpush1.msra.mxu0 %v77
    %1259 = vmatprep.subr.mxu0 0.0
    %1260 = vmatpush1.msra.mxu0 %v76
    %1261 = vmatprep.subr.mxu0 0.0
    %1262 = vmatpush1.msra.mxu0 %v75
    %1263 = vmatprep.subr.mxu0 0.0
    %1264 = vmatpush1.msra.mxu0 %v74
    %1265 = vmatprep.subr.mxu0 0.0
    %1266 = vmatpush2.msra.mxu0 0.0
    %1267 = vmatprep.subr.mxu0 0.0
    %1268 = vmatpush2.msra.mxu0 0.0
    %1269 = vmatprep.subr.mxu0 0.0
    %1270 = vmatpush2.msra.mxu0 0.0
    %1271 = vmatprep.subr.mxu0 0.0
    %1272 = vmatpush2.msra.mxu0 0.0
    %1273 = vmatprep.subr.mxu0 0.0
    %1274 = vmatpush2.msra.mxu0 0.0
    %1275 = vmatprep.subr.mxu0 0.0
    %1276 = vmatpush2.msra.mxu0 0.0
    %1277 = vmatprep.subr.mxu0 0.0
    %1278 = vmatpush2.msra.mxu0 0.0
    %1279 = vmatprep.subr.mxu0 0.0
    %1280 = vmatpush2.msra.mxu0 0.0
    %1281 = vmatprep.subr.mxu0 0.0
    %1282 = vmatpush2.msra.mxu0 0.0
    %1283 = vmatprep.subr.mxu0 0.0
    %1284 = vmatpush2.msra.mxu0 0.0
    %1285 = vmatprep.subr.mxu0 0.0
    %1286 = vmatpush2.msra.mxu0 0.0
    %1287 = vmatprep.subr.mxu0 0.0
    %1288 = vmatpush2.msra.mxu0 0.0
    %1289 = vmatprep.subr.mxu0 0.0
    %1290 = vmatpush2.msra.mxu0 0.0
    %1291 = vmatprep.subr.mxu0 0.0
    %1292 = vmatpush2.msra.mxu0 0.0
    %1293 = vmatprep.subr.mxu0 0.0
    %1294 = vmatpush2.msra.mxu0 0.0
    %1295 = vmatprep.subr.mxu0 0.0
    %1296 = vmatpush2.msra.mxu0 0.0
    %1297 = vmatprep.mubr.f32.mxu0 0.0
    %1298 = vmatmul.mubr.f32.gmra.mxu0 %v1231
    %v1299 = vpop.f32.mrf.mxu0
    %v1300 = vadd.f32 0.0, %v1299
    %v1301 = vpop.f32.mrf.mxu0
    %1302 = vdwg.mxu0
    %v1303 = vadd.f32 %v909, %v1300
    %v1304 = vtanh.pop %v1303
    %1305 = vst.msk [vmem:[#allocation3 + $0x8] sm:$0x3] %vm254, %v1304
    %v1307 = vsel %vm178, %v1304, 0
    %1309 = vmatprep.subr.mxu0 0.0
    %1310 = vmatpush1.msra.mxu0 0.0
    %1311 = vmatprep.subr.mxu0 0.0
    %1312 = vmatpush1.msra.mxu0 0.0
    %1313 = vmatprep.subr.mxu0 0.0
    %1314 = vmatpush1.msra.mxu0 0.0
    %1315 = vmatprep.subr.mxu0 0.0
    %1316 = vmatpush1.msra.mxu0 0.0
    %1317 = vmatprep.subr.mxu0 0.0
    %1318 = vmatpush1.msra.mxu0 0.0
    %1319 = vmatprep.subr.mxu0 0.0
    %1320 = vmatpush1.msra.mxu0 0.0
    %1321 = vmatprep.subr.mxu0 0.0
    %1322 = vmatpush1.msra.mxu0 0.0
    %1323 = vmatprep.subr.mxu0 0.0
    %1324 = vmatpush1.msra.mxu0 0.0
    %1325 = vmatprep.subr.mxu0 0.0
    %1326 = vmatpush1.msra.mxu0 %v81
    %1327 = vmatprep.subr.mxu0 0.0
    %1328 = vmatpush1.msra.mxu0 %v80
    %1329 = vmatprep.subr.mxu0 0.0
    %1330 = vmatpush1.msra.mxu0 %v79
    %1331 = vmatprep.subr.mxu0 0.0
    %1332 = vmatpush1.msra.mxu0 %v78
    %1333 = vmatprep.subr.mxu0 0.0
    %1334 = vmatpush1.msra.mxu0 %v77
    %1335 = vmatprep.subr.mxu0 0.0
    %1336 = vmatpush1.msra.mxu0 %v76
    %1337 = vmatprep.subr.mxu0 0.0
    %1338 = vmatpush1.msra.mxu0 %v75
    %1339 = vmatprep.subr.mxu0 0.0
    %1340 = vmatpush1.msra.mxu0 %v74
    %1341 = vmatprep.subr.mxu0 0.0
    %1342 = vmatpush2.msra.mxu0 0.0
    %1343 = vmatprep.subr.mxu0 0.0
    %1344 = vmatpush2.msra.mxu0 0.0
    %1345 = vmatprep.subr.mxu0 0.0
    %1346 = vmatpush2.msra.mxu0 0.0
    %1347 = vmatprep.subr.mxu0 0.0
    %1348 = vmatpush2.msra.mxu0 0.0
    %1349 = vmatprep.subr.mxu0 0.0
    %1350 = vmatpush2.msra.mxu0 0.0
    %1351 = vmatprep.subr.mxu0 0.0
    %1352 = vmatpush2.msra.mxu0 0.0
    %1353 = vmatprep.subr.mxu0 0.0
    %1354 = vmatpush2.msra.mxu0 0.0
    %1355 = vmatprep.subr.mxu0 0.0
    %1356 = vmatpush2.msra.mxu0 0.0
    %1357 = vmatprep.subr.mxu0 0.0
    %1358 = vmatpush2.msra.mxu0 0.0
    %1359 = vmatprep.subr.mxu0 0.0
    %1360 = vmatpush2.msra.mxu0 0.0
    %1361 = vmatprep.subr.mxu0 0.0
    %1362 = vmatpush2.msra.mxu0 0.0
    %1363 = vmatprep.subr.mxu0 0.0
    %1364 = vmatpush2.msra.mxu0 0.0
    %1365 = vmatprep.subr.mxu0 0.0
    %1366 = vmatpush2.msra.mxu0 0.0
    %1367 = vmatprep.subr.mxu0 0.0
    %1368 = vmatpush2.msra.mxu0 0.0
    %1369 = vmatprep.subr.mxu0 0.0
    %1370 = vmatpush2.msra.mxu0 0.0
    %1371 = vmatprep.subr.mxu0 0.0
    %1372 = vmatpush2.msra.mxu0 0.0
    %1373 = vmatprep.mubr.f32.mxu0 0.0
    %1374 = vmatmul.mubr.f32.gmra.mxu0 %v1307
    %v1375 = vpop.f32.mrf.mxu0
    %v1376 = vadd.f32 0.0, %v1375
    %v1377 = vpop.f32.mrf.mxu0
    %1378 = vdwg.mxu0
    %v1380 = vrot.slane %v1376, 6
    %v1382 = vadd.f32 %v909, %v1380
    %v1383 = vtanh.pop %v1382
    %1384 = vst.msk [vmem:[#allocation3 + $0x8] sm:$0xc] %vm334, %v1383
    %v1386 = vrot.slane %v1383, 2
    %v1387 = vsel %vm178, %v1386, 0
    %1389 = vmatprep.subr.mxu0 0.0
    %1390 = vmatpush1.msra.mxu0 0.0
    %1391 = vmatprep.subr.mxu0 0.0
    %1392 = vmatpush1.msra.mxu0 0.0
    %1393 = vmatprep.subr.mxu0 0.0
    %1394 = vmatpush1.msra.mxu0 0.0
    %1395 = vmatprep.subr.mxu0 0.0
    %1396 = vmatpush1.msra.mxu0 0.0
    %1397 = vmatprep.subr.mxu0 0.0
    %1398 = vmatpush1.msra.mxu0 0.0
    %1399 = vmatprep.subr.mxu0 0.0
    %1400 = vmatpush1.msra.mxu0 0.0
    %1401 = vmatprep.subr.mxu0 0.0
    %1402 = vmatpush1.msra.mxu0 0.0
    %1403 = vmatprep.subr.mxu0 0.0
    %1404 = vmatpush1.msra.mxu0 0.0
    %1405 = vmatprep.subr.mxu0 0.0
    %1406 = vmatpush1.msra.mxu0 %v81
    %1407 = vmatprep.subr.mxu0 0.0
    %1408 = vmatpush1.msra.mxu0 %v80
    %1409 = vmatprep.subr.mxu0 0.0
    %1410 = vmatpush1.msra.mxu0 %v79
    %1411 = vmatprep.subr.mxu0 0.0
    %1412 = vmatpush1.msra.mxu0 %v78
    %1413 = vmatprep.subr.mxu0 0.0
    %1414 = vmatpush1.msra.mxu0 %v77
    %1415 = vmatprep.subr.mxu0 0.0
    %1416 = vmatpush1.msra.mxu0 %v76
    %1417 = vmatprep.subr.mxu0 0.0
    %1418 = vmatpush1.msra.mxu0 %v75
    %1419 = vmatprep.subr.mxu0 0.0
    %1420 = vmatpush1.msra.mxu0 %v74
    %1421 = vmatprep.subr.mxu0 0.0
    %1422 = vmatpush2.msra.mxu0 0.0
    %1423 = vmatprep.subr.mxu0 0.0
    %1424 = vmatpush2.msra.mxu0 0.0
    %1425 = vmatprep.subr.mxu0 0.0
    %1426 = vmatpush2.msra.mxu0 0.0
    %1427 = vmatprep.subr.mxu0 0.0
    %1428 = vmatpush2.msra.mxu0 0.0
    %1429 = vmatprep.subr.mxu0 0.0
    %1430 = vmatpush2.msra.mxu0 0.0
    %1431 = vmatprep.subr.mxu0 0.0
    %1432 = vmatpush2.msra.mxu0 0.0
    %1433 = vmatprep.subr.mxu0 0.0
    %1434 = vmatpush2.msra.mxu0 0.0
    %1435 = vmatprep.subr.mxu0 0.0
    %1436 = vmatpush2.msra.mxu0 0.0
    %1437 = vmatprep.subr.mxu0 0.0
    %1438 = vmatpush2.msra.mxu0 0.0
    %1439 = vmatprep.subr.mxu0 0.0
    %1440 = vmatpush2.msra.mxu0 0.0
    %1441 = vmatprep.subr.mxu0 0.0
    %1442 = vmatpush2.msra.mxu0 0.0
    %1443 = vmatprep.subr.mxu0 0.0
    %1444 = vmatpush2.msra.mxu0 0.0
    %1445 = vmatprep.subr.mxu0 0.0
    %1446 = vmatpush2.msra.mxu0 0.0
    %1447 = vmatprep.subr.mxu0 0.0
    %1448 = vmatpush2.msra.mxu0 0.0
    %1449 = vmatprep.subr.mxu0 0.0
    %1450 = vmatpush2.msra.mxu0 0.0
    %1451 = vmatprep.subr.mxu0 0.0
    %1452 = vmatpush2.msra.mxu0 0.0
    %1453 = vmatprep.mubr.f32.mxu0 0.0
    %1454 = vmatmul.mubr.f32.gmra.mxu0 %v1387
    %v1455 = vpop.f32.mrf.mxu0
    %v1456 = vadd.f32 0.0, %v1455
    %v1457 = vpop.f32.mrf.mxu0
    %1458 = vdwg.mxu0
    %v1460 = vrot.slane %v1456, 4
    %v1462 = vadd.f32 %v909, %v1460
    %v1463 = vtanh.pop %v1462
    %1464 = vst.msk [vmem:[#allocation3 + $0x8] sm:$0x30] %vm415, %v1463
    %v1466 = vrot.slane %v1463, 4
    %v1467 = vsel %vm178, %v1466, 0
    %1469 = vmatprep.subr.mxu0 0.0
    %1470 = vmatpush1.msra.mxu0 0.0
    %1471 = vmatprep.subr.mxu0 0.0
    %1472 = vmatpush1.msra.mxu0 0.0
    %1473 = vmatprep.subr.mxu0 0.0
    %1474 = vmatpush1.msra.mxu0 0.0
    %1475 = vmatprep.subr.mxu0 0.0
    %1476 = vmatpush1.msra.mxu0 0.0
    %1477 = vmatprep.subr.mxu0 0.0
    %1478 = vmatpush1.msra.mxu0 0.0
    %1479 = vmatprep.subr.mxu0 0.0
    %1480 = vmatpush1.msra.mxu0 0.0
    %1481 = vmatprep.subr.mxu0 0.0
    %1482 = vmatpush1.msra.mxu0 0.0
    %1483 = vmatprep.subr.mxu0 0.0
    %1484 = vmatpush1.msra.mxu0 0.0
    %1485 = vmatprep.subr.mxu0 0.0
    %1486 = vmatpush1.msra.mxu0 %v81
    %1487 = vmatprep.subr.mxu0 0.0
    %1488 = vmatpush1.msra.mxu0 %v80
    %1489 = vmatprep.subr.mxu0 0.0
    %1490 = vmatpush1.msra.mxu0 %v79
    %1491 = vmatprep.subr.mxu0 0.0
    %1492 = vmatpush1.msra.mxu0 %v78
    %1493 = vmatprep.subr.mxu0 0.0
    %1494 = vmatpush1.msra.mxu0 %v77
    %1495 = vmatprep.subr.mxu0 0.0
    %1496 = vmatpush1.msra.mxu0 %v76
    %1497 = vmatprep.subr.mxu0 0.0
    %1498 = vmatpush1.msra.mxu0 %v75
    %1499 = vmatprep.subr.mxu0 0.0
    %1500 = vmatpush1.msra.mxu0 %v74
    %1501 = vmatprep.subr.mxu0 0.0
    %1502 = vmatpush2.msra.mxu0 0.0
    %1503 = vmatprep.subr.mxu0 0.0
    %1504 = vmatpush2.msra.mxu0 0.0
    %1505 = vmatprep.subr.mxu0 0.0
    %1506 = vmatpush2.msra.mxu0 0.0
    %1507 = vmatprep.subr.mxu0 0.0
    %1508 = vmatpush2.msra.mxu0 0.0
    %1509 = vmatprep.subr.mxu0 0.0
    %1510 = vmatpush2.msra.mxu0 0.0
    %1511 = vmatprep.subr.mxu0 0.0
    %1512 = vmatpush2.msra.mxu0 0.0
    %1513 = vmatprep.subr.mxu0 0.0
    %1514 = vmatpush2.msra.mxu0 0.0
    %1515 = vmatprep.subr.mxu0 0.0
    %1516 = vmatpush2.msra.mxu0 0.0
    %1517 = vmatprep.subr.mxu0 0.0
    %1518 = vmatpush2.msra.mxu0 0.0
    %1519 = vmatprep.subr.mxu0 0.0
    %1520 = vmatpush2.msra.mxu0 0.0
    %1521 = vmatprep.subr.mxu0 0.0
    %1522 = vmatpush2.msra.mxu0 0.0
    %1523 = vmatprep.subr.mxu0 0.0
    %1524 = vmatpush2.msra.mxu0 0.0
    %1525 = vmatprep.subr.mxu0 0.0
    %1526 = vmatpush2.msra.mxu0 0.0
    %1527 = vmatprep.subr.mxu0 0.0
    %1528 = vmatpush2.msra.mxu0 0.0
    %1529 = vmatprep.subr.mxu0 0.0
    %1530 = vmatpush2.msra.mxu0 0.0
    %1531 = vmatprep.subr.mxu0 0.0
    %1532 = vmatpush2.msra.mxu0 0.0
    %1533 = vmatprep.mubr.f32.mxu0 0.0
    %1534 = vmatmul.mubr.f32.gmra.mxu0 %v1467
    %v1535 = vpop.f32.mrf.mxu0
    %v1536 = vadd.f32 0.0, %v1535
    %v1537 = vpop.f32.mrf.mxu0
    %1538 = vdwg.mxu0
    %v1540 = vrot.slane %v1536, 2
    %v1542 = vadd.f32 %v909, %v1540
    %v1543 = vtanh.pop %v1542
    %1544 = vst.msk [vmem:[#allocation3 + $0x8] sm:$0xc0] %vm496, %v1543
    %v1545 = vld [vmem:[#allocation3] sm:$0xff]
    %v1546 = vld [vmem:[#allocation3 + $0x8] sm:$0xff]
    %v1547 = vld [vmem:[%s8] sm:$0xff]
    %v1548 = vld [vmem:[%s8 + $0x8] sm:$0xff]
    %v1549 = vld [vmem:[%s8 + $0x10] sm:$0xff]
    %v1550 = vld [vmem:[%s8 + $0x18] sm:$0xff]
    %v1551 = vld [vmem:[%s8 + $0x20] sm:$0xff]
    %v1552 = vld [vmem:[%s8 + $0x28] sm:$0xff]
    %v1553 = vld [vmem:[%s8 + $0x30] sm:$0xff]
    %v1554 = vld [vmem:[%s8 + $0x38] sm:$0xff]
    %v1555 = vld [vmem:[%s9] sm:$0x1]
    %v1557 = vlaneseq
    %v1558 = vshrl.u32 %v1557, 7
    %v1559 = vsub.s32 0, %v1558
    %v1560 = vrot.slane %v1555, %v1559
    %v1563 = vsel %vm178, %v1545, 0
    %v1566 = vsel %vm178, %v1546, 0
    %1568 = vmatprep.subr.mxu0 0.0
    %1569 = vmatpush1.msra.mxu0 0.0
    %1570 = vmatprep.subr.mxu0 0.0
    %1571 = vmatpush1.msra.mxu0 0.0
    %1572 = vmatprep.subr.mxu0 0.0
    %1573 = vmatpush1.msra.mxu0 0.0
    %1574 = vmatprep.subr.mxu0 0.0
    %1575 = vmatpush1.msra.mxu0 0.0
    %1576 = vmatprep.subr.mxu0 0.0
    %1577 = vmatpush1.msra.mxu0 0.0
    %1578 = vmatprep.subr.mxu0 0.0
    %1579 = vmatpush1.msra.mxu0 0.0
    %1580 = vmatprep.subr.mxu0 0.0
    %1581 = vmatpush1.msra.mxu0 0.0
    %1582 = vmatprep.subr.mxu0 0.0
    %1583 = vmatpush1.msra.mxu0 0.0
    %1584 = vmatprep.subr.mxu0 0.0
    %1585 = vmatpush1.msra.mxu0 %v1554
    %1586 = vmatprep.subr.mxu0 0.0
    %1587 = vmatpush1.msra.mxu0 %v1553
    %1588 = vmatprep.subr.mxu0 0.0
    %1589 = vmatpush1.msra.mxu0 %v1552
    %1590 = vmatprep.subr.mxu0 0.0
    %1591 = vmatpush1.msra.mxu0 %v1551
    %1592 = vmatprep.subr.mxu0 0.0
    %1593 = vmatpush1.msra.mxu0 %v1550
    %1594 = vmatprep.subr.mxu0 0.0
    %1595 = vmatpush1.msra.mxu0 %v1549
    %1596 = vmatprep.subr.mxu0 0.0
    %1597 = vmatpush1.msra.mxu0 %v1548
    %1598 = vmatprep.subr.mxu0 0.0
    %1599 = vmatpush1.msra.mxu0 %v1547
    %1600 = vmatprep.subr.mxu0 0.0
    %1601 = vmatpush2.msra.mxu0 0.0
    %1602 = vmatprep.subr.mxu0 0.0
    %1603 = vmatpush2.msra.mxu0 0.0
    %1604 = vmatprep.subr.mxu0 0.0
    %1605 = vmatpush2.msra.mxu0 0.0
    %1606 = vmatprep.subr.mxu0 0.0
    %1607 = vmatpush2.msra.mxu0 0.0
    %1608 = vmatprep.subr.mxu0 0.0
    %1609 = vmatpush2.msra.mxu0 0.0
    %1610 = vmatprep.subr.mxu0 0.0
    %1611 = vmatpush2.msra.mxu0 0.0
    %1612 = vmatprep.subr.mxu0 0.0
    %1613 = vmatpush2.msra.mxu0 0.0
    %1614 = vmatprep.subr.mxu0 0.0
    %1615 = vmatpush2.msra.mxu0 0.0
    %1616 = vmatprep.subr.mxu0 0.0
    %1617 = vmatpush2.msra.mxu0 0.0
    %1618 = vmatprep.subr.mxu0 0.0
    %1619 = vmatpush2.msra.mxu0 0.0
    %1620 = vmatprep.subr.mxu0 0.0
    %1621 = vmatpush2.msra.mxu0 0.0
    %1622 = vmatprep.subr.mxu0 0.0
    %1623 = vmatpush2.msra.mxu0 0.0
    %1624 = vmatprep.subr.mxu0 0.0
    %1625 = vmatpush2.msra.mxu0 0.0
    %1626 = vmatprep.subr.mxu0 0.0
    %1627 = vmatpush2.msra.mxu0 0.0
    %1628 = vmatprep.subr.mxu0 0.0
    %1629 = vmatpush2.msra.mxu0 0.0
    %1630 = vmatprep.subr.mxu0 0.0
    %1631 = vmatpush2.msra.mxu0 0.0
    %1632 = vmatprep.mubr.f32.mxu0 0.0
    %1633 = vmatmul.mubr.f32.gmra.mxu0 %v1563
    %v1634 = vpop.f32.mrf.mxu0
    %v1635 = vadd.f32 %v1560, %v1634
    %v1636 = vpop.f32.mrf.mxu0
    %1637 = vmatprep.mubr.f32.mxu0 0.0
    %1638 = vmatmul.mubr.f32.gmra.mxu0 %v1566
    %v1639 = vpop.f32.mrf.mxu0
    %v1640 = vadd.f32 %v1560, %v1639
    %v1641 = vpop.f32.mrf.mxu0
    %1642 = vdwg.mxu0
    %1643 = vst.msk [vmem:[%s10] sm:$0xff] %vm95, %v1635
    %1644 = vst.msk [vmem:[%s10 + $0x8] sm:$0xff] %vm95, %v1640
    %1645 = vst.msk [vmem:[#allocation9 - $0x6] sm:$0xc0] %vm496, %v812
    %s1646 = scalar_lea.vmem [#allocation9], 2
    %1647 = vst.msk [vmem:[%s1646 - $0x6] sm:$0xc0] %vm496, %v1543
    // Predicated region
    $region50: #{rnn_model_forward.1} parent=1 // pred_check
      _
    $region51: #{rnn_model_forward.1} parent=1 // pred_check_branch
      %1649 = sbr.rel (0) target = $region53
    $region52: #{rnn_model_forward.1} parent=1 // pred_region
      _
    $region53: #{rnn_model_forward.1} parent=1 // pred_fallthru
      _
    // Predicated region
    $region54: #{rnn_model_forward.1} parent=1 // pred_check
      _
    $region55: #{rnn_model_forward.1} parent=1 // pred_check_branch
      %1651 = sbr.rel (0) target = $region57
    $region56: #{rnn_model_forward.1} parent=1 // pred_region
      %s1653 = ssub.s32 64, 64
      %1654 = vsyncadd [#allocation6], %s1653
      %s1655 = sshll.u32 [#allocation9], 4
      %s1656 = int_to_ptr.vmem [resolvable:$true] %s1655
      %1661 = dma.vmem_to_hbm [thread:$0]  %s1656, 64, %s11, [#allocation6], 32, 32, 2
    $region57: #{rnn_model_forward.1} parent=1 // pred_fallthru
      _
    // Predicated region
    $region58: #{rnn_model_forward.1} parent=1 // pred_check
      _
    $region59: #{rnn_model_forward.1} parent=1 // pred_check_branch
      %1663 = sbr.rel (0) target = $region61
    $region60: #{rnn_model_forward.1} parent=1 // pred_region
      _
    $region61: #{rnn_model_forward.1} parent=1 // pred_fallthru
      _
    // Predicated region
    $region62: #{rnn_model_forward.1} parent=1 // pred_check
      _
    $region63: #{rnn_model_forward.1} parent=1 // pred_check_branch
      %1665 = sbr.rel (0) target = $region65
    $region64: #{rnn_model_forward.1} parent=1 // pred_region
      %1666 = dma.done [#allocation6], 64
    $region65: #{rnn_model_forward.1} parent=1 // pred_fallthru
      _
    %1667 = vsyncpa [#allocation5], 1
    %1668 = vsyncpa [#allocation8], 1
    %1669 = vsyncpa [#allocation6], 1

</llo_original>
